<compile_context>
chip_gen: v5e
topology: v5e:2x2
jax: 0.10.0
libtpu: 0.0.40
codegen_flags: <defaults>
</compile_context>

<pallas_src>
import functools

import jax
import jax.numpy as jnp
from jax import lax
from jax.experimental import pallas as pl
from jax.experimental.pallas import tpu as pltpu


# ----------------------------- Pallas kernel ------------------------------ #
def _conv3x3_flat(act, w2d, mask_l, mask_r, out_w):
    """3x3 SAME conv on a flattened-spatial, channel-major activation.

    act:    (C, L)       L = OH*OW, spatial flattened row-major (width OW)
    w2d:    (Cout, 9*C)  taps ordered (dy, dx, ci)
    mask_l: (1, L)       zero at left image-border columns  (for dx == 0 taps)
    mask_r: (1, L)       zero at right image-border columns (for dx == 2 taps)
    out_w:  OW (static)
    returns (Cout, L) float32
    """
    C, L = act.shape
    zpad = jnp.zeros((C, out_w + 1), act.dtype)
    # Zero halo lives only in VMEM: pflat[c, j] = act[c, j - (OW+1)] inside.
    pflat = jnp.concatenate([zpad, act, zpad], axis=1)       # (C, L + 2*OW + 2)

    taps = []
    for dy in range(3):
        for dx in range(3):
            shift = dy * out_w + dx
            s = lax.slice(pflat, (0, shift), (C, shift + L))  # static lane shift
            if dx == 0:
                s = s * mask_l        # kill row-wrap reads at left border
            elif dx == 2:
                s = s * mask_r        # kill row-wrap reads at right border
            taps.append(s)
    patches = jnp.concatenate(taps, axis=0)                   # (9*C, L)

    # One MXU contraction with K = 9*C, lane-dense N = L.
    return jnp.dot(w2d, patches, preferred_element_type=jnp.float32)


def _decoder_block_kernel(u_ref, masks_ref, w1_ref, s1_ref, b1_ref,
                          w2_ref, s2_ref, b2_ref, o_ref, *, out_w):
    """Fused (conv3x3 + BN + ReLU) x 2 on one batch element.

    u_ref:     (1, Ccat, L)   upsampled+concatenated input, flat spatial
    masks_ref: (2, L)         [left-border mask, right-border mask]
    w1_ref:    (Cout, 9*Ccat) ; w2_ref: (Cout, 9*Cout)
    s*/b*:     (Cout, 1)      folded BatchNorm scale / bias
    o_ref:     (1, Cout, L)
    """
    u = u_ref[0]                                   # (Ccat, L)
    masks = masks_ref[...]
    mask_l = masks[0:1, :]
    mask_r = masks[1:2, :]

    y1 = _conv3x3_flat(u, w1_ref[...], mask_l, mask_r, out_w)
    y1 = jnp.maximum(y1 * s1_ref[...] + b1_ref[...], 0.0)     # BN + ReLU

    y2 = _conv3x3_flat(y1, w2_ref[...], mask_l, mask_r, out_w)
    y2 = jnp.maximum(y2 * s2_ref[...] + b2_ref[...], 0.0)     # BN + ReLU

    o_ref[0] = y2.astype(o_ref.dtype)              # lane-dense (Cout, L) store


# ------------------------- DecoderBlock wrapper ---------------------------- #
def fold_bn(gamma, beta, running_mean, running_var, eps=1e-5):
    scale = gamma / jnp.sqrt(running_var + eps)
    bias = beta - running_mean * scale
    return scale, bias


def _w_to_2d(w_hwio):
    """(3,3,Cin,Cout) HWIO -> (Cout, 9*Cin), taps ordered (dy, dx, ci)."""
    kh, kw, cin, cout = w_hwio.shape
    return jnp.transpose(w_hwio, (3, 0, 1, 2)).reshape(cout, kh * kw * cin)


def decoder_block_forward(x_nchw, skip_nchw, params):
    """Forward pass matching DecoderBlock.forward (attention_type=None)."""
    N = x_nchw.shape[0]
    # nearest 2x upsample + channel concat (attention1 is Identity).
    x = jnp.repeat(jnp.repeat(x_nchw, 2, axis=2), 2, axis=3)
    if skip_nchw is not None:
        x = jnp.concatenate([x, skip_nchw], axis=1)
    _, Ccat, OH, OW = x.shape
    L = OH * OW
    u_flat = x.reshape(N, Ccat, L)          # free row-major metadata reshape

    Cout = params["w1"].shape[-1]
    w1_2d = _w_to_2d(params["w1"])
    w2_2d = _w_to_2d(params["w2"])
    s1, b1 = fold_bn(params["bn1_gamma"], params["bn1_beta"],
                     params["bn1_mean"], params["bn1_var"])
    s2, b2 = fold_bn(params["bn2_gamma"], params["bn2_beta"],
                     params["bn2_mean"], params["bn2_var"])

    # Border-column masks (zero where a flat shift would wrap across rows).
    col = jnp.arange(L, dtype=jnp.int32) % OW
    masks = jnp.stack([(col != 0).astype(x.dtype),
                       (col != OW - 1).astype(x.dtype)], axis=0)   # (2, L)

    kernel = functools.partial(_decoder_block_kernel, out_w=OW)
    out_flat = pl.pallas_call(
        kernel,
        out_shape=jax.ShapeDtypeStruct((N, Cout, L), x.dtype),
        grid=(N,),
        in_specs=[
            pl.BlockSpec((1, Ccat, L), lambda n: (n, 0, 0)),
            pl.BlockSpec((2, L), lambda n: (0, 0)),
            pl.BlockSpec((Cout, 9 * Ccat), lambda n: (0, 0)),
            pl.BlockSpec((Cout, 1), lambda n: (0, 0)),
            pl.BlockSpec((Cout, 1), lambda n: (0, 0)),
            pl.BlockSpec((Cout, 9 * Cout), lambda n: (0, 0)),
            pl.BlockSpec((Cout, 1), lambda n: (0, 0)),
            pl.BlockSpec((Cout, 1), lambda n: (0, 0)),
        ],
        out_specs=pl.BlockSpec((1, Cout, L), lambda n: (n, 0, 0)),
        compiler_params=pltpu.CompilerParams(
            dimension_semantics=("parallel",)),
    )(u_flat, masks, w1_2d,
      s1.reshape(Cout, 1), b1.reshape(Cout, 1),
      w2_2d, s2.reshape(Cout, 1), b2.reshape(Cout, 1))

    # attention2 is Identity; output stays NCHW (free reshape).
    return out_flat.reshape(N, Cout, OH, OW)


# ------------------------------ Reference ---------------------------------- #
def _conv_bn_relu_ref(x_nchw, w_hwio, gamma, beta, mean, var):
    w_oihw = jnp.transpose(w_hwio, (3, 2, 0, 1))
    y = lax.conv_general_dilated(
        x_nchw, w_oihw, window_strides=(1, 1), padding="SAME",
        dimension_numbers=("NCHW", "OIHW", "NCHW"))
    s, b = fold_bn(gamma, beta, mean, var)
    return jnp.maximum(y * s[None, :, None, None] + b[None, :, None, None], 0.0)


def decoder_block_ref(x_nchw, skip_nchw, params):
    x = jnp.repeat(jnp.repeat(x_nchw, 2, axis=2), 2, axis=3)
    if skip_nchw is not None:
        x = jnp.concatenate([x, skip_nchw], axis=1)
    x = _conv_bn_relu_ref(x, params["w1"], params["bn1_gamma"],
                          params["bn1_beta"], params["bn1_mean"],
                          params["bn1_var"])
    x = _conv_bn_relu_ref(x, params["w2"], params["bn2_gamma"],
                          params["bn2_beta"], params["bn2_mean"],
                          params["bn2_var"])
    return x


# --------------------------------- Main ------------------------------------ #
if __name__ == "__main__":
    # DecoderBlock(in_channels=4, skip_channels=4, out_channels=8)
    N, Cin, Cskip, Cout = 2, 4, 4, 8
    H, W = 16, 16                    # x spatial; skip is 2x larger (32x32)
    Ccat = Cin + Cskip

    key = jax.random.PRNGKey(0)
    k = jax.random.split(key, 12)

    x = jax.random.normal(k[0], (N, Cin, H, W), jnp.float32)
    skip = jax.random.normal(k[1], (N, Cskip, 2 * H, 2 * W), jnp.float32)

    params = {
        # conv weights in HWIO (3,3,Cin,Cout); no conv bias (use_batchnorm=True)
        "w1": 0.1 * jax.random.normal(k[2], (3, 3, Ccat, Cout), jnp.float32),
        "w2": 0.1 * jax.random.normal(k[3], (3, 3, Cout, Cout), jnp.float32),
        "bn1_gamma": 1.0 + 0.1 * jax.random.normal(k[4], (Cout,), jnp.float32),
        "bn1_beta": 0.1 * jax.random.normal(k[5], (Cout,), jnp.float32),
        "bn1_mean": 0.1 * jax.random.normal(k[6], (Cout,), jnp.float32),
        "bn1_var": jnp.abs(1.0 + 0.1 * jax.random.normal(k[7], (Cout,), jnp.float32)),
        "bn2_gamma": 1.0 + 0.1 * jax.random.normal(k[8], (Cout,), jnp.float32),
        "bn2_beta": 0.1 * jax.random.normal(k[9], (Cout,), jnp.float32),
        "bn2_mean": 0.1 * jax.random.normal(k[10], (Cout,), jnp.float32),
        "bn2_var": jnp.abs(1.0 + 0.1 * jax.random.normal(k[11], (Cout,), jnp.float32)),
    }

    out = jax.jit(decoder_block_forward)(x, skip, params)
    out = jax.block_until_ready(out)
    assert out.shape == (N, Cout, 2 * H, 2 * W), out.shape

    ref = jax.block_until_ready(decoder_block_ref(x, skip, params))
    assert jnp.allclose(out, ref, rtol=1e-4, atol=1e-4), float(
        jnp.max(jnp.abs(out - ref)))

    print("KERNEL_OK")
</pallas_src>

<mosaic_0001>
module attributes {stable_mosaic.version = 11 : i64} {
  func.func @_decoder_block_kernel(%arg0: i32, %arg1: memref<1x8x1024xf32, #tpu.memory_space<vmem>>, %arg2: memref<2x1024xf32, #tpu.memory_space<vmem>>, %arg3: memref<8x72xf32, #tpu.memory_space<vmem>>, %arg4: memref<8x1xf32, #tpu.memory_space<vmem>>, %arg5: memref<8x1xf32, #tpu.memory_space<vmem>>, %arg6: memref<8x72xf32, #tpu.memory_space<vmem>>, %arg7: memref<8x1xf32, #tpu.memory_space<vmem>>, %arg8: memref<8x1xf32, #tpu.memory_space<vmem>>, %arg9: memref<1x8x1024xf32, #tpu.memory_space<vmem>>) attributes {dimension_semantics = [#tpu.dimension_semantics<parallel>], iteration_bounds = array<i64: 2>, scalar_prefetch = 0 : i64, scratch_operands = 0 : i64, tpu.core_type = #tpu.core_type<tc>, window_params = [{transform_indices = @transform_0, window_bounds = array<i64: 1, 8, 1024>}, {pipeline_mode = #tpu.pipeline_mode<synchronous>, transform_indices = @transform_1, window_bounds = array<i64: 2, 1024>}, {pipeline_mode = #tpu.pipeline_mode<synchronous>, transform_indices = @transform_2, window_bounds = array<i64: 8, 72>}, {pipeline_mode = #tpu.pipeline_mode<synchronous>, transform_indices = @transform_3, window_bounds = array<i64: 8, 1>}, {pipeline_mode = #tpu.pipeline_mode<synchronous>, transform_indices = @transform_4, window_bounds = array<i64: 8, 1>}, {pipeline_mode = #tpu.pipeline_mode<synchronous>, transform_indices = @transform_5, window_bounds = array<i64: 8, 72>}, {pipeline_mode = #tpu.pipeline_mode<synchronous>, transform_indices = @transform_6, window_bounds = array<i64: 8, 1>}, {pipeline_mode = #tpu.pipeline_mode<synchronous>, transform_indices = @transform_7, window_bounds = array<i64: 8, 1>}, {transform_indices = @transform_8, window_bounds = array<i64: 1, 8, 1024>}]} {
    %c0 = arith.constant 0 : index
    %c0_0 = arith.constant 0 : index
    %c0_1 = arith.constant 0 : index
    %0 = vector.load %arg1[%c0, %c0_0, %c0_1] : memref<1x8x1024xf32, #tpu.memory_space<vmem>>, vector<1x8x1024xf32>
    %1 = vector.shape_cast %0 : vector<1x8x1024xf32> to vector<8x1024xf32>
    %c0_2 = arith.constant 0 : index
    %c0_3 = arith.constant 0 : index
    %2 = vector.load %arg2[%c0_2, %c0_3] : memref<2x1024xf32, #tpu.memory_space<vmem>>, vector<2x1024xf32>
    %3 = vector.extract_strided_slice %2 {offsets = [0, 0], sizes = [1, 1024], strides = [1, 1]} : vector<2x1024xf32> to vector<1x1024xf32>
    %4 = vector.extract_strided_slice %2 {offsets = [1, 0], sizes = [1, 1024], strides = [1, 1]} : vector<2x1024xf32> to vector<1x1024xf32>
    %c0_4 = arith.constant 0 : index
    %c0_5 = arith.constant 0 : index
    %5 = vector.load %arg3[%c0_4, %c0_5] : memref<8x72xf32, #tpu.memory_space<vmem>>, vector<8x72xf32>
    %cst = arith.constant 0.000000e+00 : f32
    %6 = vector.broadcast %cst : f32 to vector<8x33xf32>
    %7 = tpu.concatenate %6, %1, %6 in 1 : vector<8x33xf32>, vector<8x1024xf32>, vector<8x33xf32> -> vector<8x1090xf32>
    %8 = vector.extract_strided_slice %7 {offsets = [0, 0], sizes = [8, 1024], strides = [1, 1]} : vector<8x1090xf32> to vector<8x1024xf32>
    %9 = vector.broadcast %3 : vector<1x1024xf32> to vector<8x1024xf32>
    %10 = arith.mulf %8, %9 : vector<8x1024xf32>
    %11 = vector.extract_strided_slice %7 {offsets = [0, 1], sizes = [8, 1024], strides = [1, 1]} : vector<8x1090xf32> to vector<8x1024xf32>
    %12 = vector.extract_strided_slice %7 {offsets = [0, 2], sizes = [8, 1024], strides = [1, 1]} : vector<8x1090xf32> to vector<8x1024xf32>
    %13 = vector.broadcast %4 : vector<1x1024xf32> to vector<8x1024xf32>
    %14 = arith.mulf %12, %13 : vector<8x1024xf32>
    %15 = vector.extract_strided_slice %7 {offsets = [0, 32], sizes = [8, 1024], strides = [1, 1]} : vector<8x1090xf32> to vector<8x1024xf32>
    %16 = vector.broadcast %3 : vector<1x1024xf32> to vector<8x1024xf32>
    %17 = arith.mulf %15, %16 : vector<8x1024xf32>
    %18 = vector.extract_strided_slice %7 {offsets = [0, 33], sizes = [8, 1024], strides = [1, 1]} : vector<8x1090xf32> to vector<8x1024xf32>
    %19 = vector.extract_strided_slice %7 {offsets = [0, 34], sizes = [8, 1024], strides = [1, 1]} : vector<8x1090xf32> to vector<8x1024xf32>
    %20 = vector.broadcast %4 : vector<1x1024xf32> to vector<8x1024xf32>
    %21 = arith.mulf %19, %20 : vector<8x1024xf32>
    %22 = vector.extract_strided_slice %7 {offsets = [0, 64], sizes = [8, 1024], strides = [1, 1]} : vector<8x1090xf32> to vector<8x1024xf32>
    %23 = vector.broadcast %3 : vector<1x1024xf32> to vector<8x1024xf32>
    %24 = arith.mulf %22, %23 : vector<8x1024xf32>
    %25 = vector.extract_strided_slice %7 {offsets = [0, 65], sizes = [8, 1024], strides = [1, 1]} : vector<8x1090xf32> to vector<8x1024xf32>
    %26 = vector.extract_strided_slice %7 {offsets = [0, 66], sizes = [8, 1024], strides = [1, 1]} : vector<8x1090xf32> to vector<8x1024xf32>
    %27 = vector.broadcast %4 : vector<1x1024xf32> to vector<8x1024xf32>
    %28 = arith.mulf %26, %27 : vector<8x1024xf32>
    %29 = tpu.concatenate %10, %11, %14, %17, %18, %21, %24, %25, %28 in 0 : vector<8x1024xf32>, vector<8x1024xf32>, vector<8x1024xf32>, vector<8x1024xf32>, vector<8x1024xf32>, vector<8x1024xf32>, vector<8x1024xf32>, vector<8x1024xf32>, vector<8x1024xf32> -> vector<72x1024xf32>
    %cst_6 = arith.constant dense<0.000000e+00> : vector<8x1024xf32>
    %30 = tpu.matmul %5, %29, %cst_6 {dimension_numbers = #tpu.dot_dimension_numbers<[1], [0], [0], [1], [0, 0, 1, 1], [], []>} : vector<8x72xf32>, vector<72x1024xf32>, vector<8x1024xf32> -> vector<8x1024xf32>
    %c0_7 = arith.constant 0 : index
    %c0_8 = arith.constant 0 : index
    %31 = vector.load %arg4[%c0_7, %c0_8] : memref<8x1xf32, #tpu.memory_space<vmem>>, vector<8x1xf32>
    %32 = vector.broadcast %31 : vector<8x1xf32> to vector<8x1024xf32>
    %33 = arith.mulf %30, %32 : vector<8x1024xf32>
    %c0_9 = arith.constant 0 : index
    %c0_10 = arith.constant 0 : index
    %34 = vector.load %arg5[%c0_9, %c0_10] : memref<8x1xf32, #tpu.memory_space<vmem>>, vector<8x1xf32>
    %35 = vector.broadcast %34 : vector<8x1xf32> to vector<8x1024xf32>
    %36 = arith.addf %33, %35 : vector<8x1024xf32>
    %cst_11 = arith.constant 0.000000e+00 : f32
    %37 = vector.broadcast %cst_11 : f32 to vector<8x1024xf32>
    %38 = arith.maximumf %36, %37 : vector<8x1024xf32>
    %c0_12 = arith.constant 0 : index
    %c0_13 = arith.constant 0 : index
    %39 = vector.load %arg6[%c0_12, %c0_13] : memref<8x72xf32, #tpu.memory_space<vmem>>, vector<8x72xf32>
    %cst_14 = arith.constant 0.000000e+00 : f32
    %40 = vector.broadcast %cst_14 : f32 to vector<8x33xf32>
    %41 = tpu.concatenate %40, %38, %40 in 1 : vector<8x33xf32>, vector<8x1024xf32>, vector<8x33xf32> -> vector<8x1090xf32>
    %42 = vector.extract_strided_slice %41 {offsets = [0, 0], sizes = [8, 1024], strides = [1, 1]} : vector<8x1090xf32> to vector<8x1024xf32>
    %43 = vector.broadcast %3 : vector<1x1024xf32> to vector<8x1024xf32>
    %44 = arith.mulf %42, %43 : vector<8x1024xf32>
    %45 = vector.extract_strided_slice %41 {offsets = [0, 1], sizes = [8, 1024], strides = [1, 1]} : vector<8x1090xf32> to vector<8x1024xf32>
    %46 = vector.extract_strided_slice %41 {offsets = [0, 2], sizes = [8, 1024], strides = [1, 1]} : vector<8x1090xf32> to vector<8x1024xf32>
    %47 = vector.broadcast %4 : vector<1x1024xf32> to vector<8x1024xf32>
    %48 = arith.mulf %46, %47 : vector<8x1024xf32>
    %49 = vector.extract_strided_slice %41 {offsets = [0, 32], sizes = [8, 1024], strides = [1, 1]} : vector<8x1090xf32> to vector<8x1024xf32>
    %50 = vector.broadcast %3 : vector<1x1024xf32> to vector<8x1024xf32>
    %51 = arith.mulf %49, %50 : vector<8x1024xf32>
    %52 = vector.extract_strided_slice %41 {offsets = [0, 33], sizes = [8, 1024], strides = [1, 1]} : vector<8x1090xf32> to vector<8x1024xf32>
    %53 = vector.extract_strided_slice %41 {offsets = [0, 34], sizes = [8, 1024], strides = [1, 1]} : vector<8x1090xf32> to vector<8x1024xf32>
    %54 = vector.broadcast %4 : vector<1x1024xf32> to vector<8x1024xf32>
    %55 = arith.mulf %53, %54 : vector<8x1024xf32>
    %56 = vector.extract_strided_slice %41 {offsets = [0, 64], sizes = [8, 1024], strides = [1, 1]} : vector<8x1090xf32> to vector<8x1024xf32>
    %57 = vector.broadcast %3 : vector<1x1024xf32> to vector<8x1024xf32>
    %58 = arith.mulf %56, %57 : vector<8x1024xf32>
    %59 = vector.extract_strided_slice %41 {offsets = [0, 65], sizes = [8, 1024], strides = [1, 1]} : vector<8x1090xf32> to vector<8x1024xf32>
    %60 = vector.extract_strided_slice %41 {offsets = [0, 66], sizes = [8, 1024], strides = [1, 1]} : vector<8x1090xf32> to vector<8x1024xf32>
    %61 = vector.broadcast %4 : vector<1x1024xf32> to vector<8x1024xf32>
    %62 = arith.mulf %60, %61 : vector<8x1024xf32>
    %63 = tpu.concatenate %44, %45, %48, %51, %52, %55, %58, %59, %62 in 0 : vector<8x1024xf32>, vector<8x1024xf32>, vector<8x1024xf32>, vector<8x1024xf32>, vector<8x1024xf32>, vector<8x1024xf32>, vector<8x1024xf32>, vector<8x1024xf32>, vector<8x1024xf32> -> vector<72x1024xf32>
    %cst_15 = arith.constant dense<0.000000e+00> : vector<8x1024xf32>
    %64 = tpu.matmul %39, %63, %cst_15 {dimension_numbers = #tpu.dot_dimension_numbers<[1], [0], [0], [1], [0, 0, 1, 1], [], []>} : vector<8x72xf32>, vector<72x1024xf32>, vector<8x1024xf32> -> vector<8x1024xf32>
    %c0_16 = arith.constant 0 : index
    %c0_17 = arith.constant 0 : index
    %65 = vector.load %arg7[%c0_16, %c0_17] : memref<8x1xf32, #tpu.memory_space<vmem>>, vector<8x1xf32>
    %66 = vector.broadcast %65 : vector<8x1xf32> to vector<8x1024xf32>
    %67 = arith.mulf %64, %66 : vector<8x1024xf32>
    %c0_18 = arith.constant 0 : index
    %c0_19 = arith.constant 0 : index
    %68 = vector.load %arg8[%c0_18, %c0_19] : memref<8x1xf32, #tpu.memory_space<vmem>>, vector<8x1xf32>
    %69 = vector.broadcast %68 : vector<8x1xf32> to vector<8x1024xf32>
    %70 = arith.addf %67, %69 : vector<8x1024xf32>
    %cst_20 = arith.constant 0.000000e+00 : f32
    %71 = vector.broadcast %cst_20 : f32 to vector<8x1024xf32>
    %72 = arith.maximumf %70, %71 : vector<8x1024xf32>
    %c0_21 = arith.constant 0 : index
    %c0_22 = arith.constant 0 : index
    %c0_23 = arith.constant 0 : index
    %73 = vector.load %arg9[%c0_21, %c0_22, %c0_23] : memref<1x8x1024xf32, #tpu.memory_space<vmem>>, vector<1x8x1024xf32>
    %74 = vector.shape_cast %73 : vector<1x8x1024xf32> to vector<8x1024xf32>
    %75 = vector.shape_cast %72 : vector<8x1024xf32> to vector<1x8x1024xf32>
    tpu.vector_store %arg9[%c0_21, %c0_22, %c0_23], %75 {strides = array<i32>} : memref<1x8x1024xf32, #tpu.memory_space<vmem>>, vector<1x8x1024xf32>,
    return
  }
  func.func @transform_0(%arg0: i32) -> (i32, i32, i32) {
    %c0_i32 = arith.constant 0 : i32
    %c0_i32_0 = arith.constant 0 : i32
    %c0_i32_1 = arith.constant 0 : i32
    return %arg0, %c0_i32, %c0_i32_0 : i32, i32, i32
  }
  func.func @transform_1(%arg0: i32) -> (i32, i32) {
    %c0_i32 = arith.constant 0 : i32
    %c0_i32_0 = arith.constant 0 : i32
    %c0_i32_1 = arith.constant 0 : i32
    return %c0_i32, %c0_i32_0 : i32, i32
  }
  func.func @transform_2(%arg0: i32) -> (i32, i32) {
    %c0_i32 = arith.constant 0 : i32
    %c0_i32_0 = arith.constant 0 : i32
    %c0_i32_1 = arith.constant 0 : i32
    return %c0_i32, %c0_i32_0 : i32, i32
  }
  func.func @transform_3(%arg0: i32) -> (i32, i32) {
    %c0_i32 = arith.constant 0 : i32
    %c0_i32_0 = arith.constant 0 : i32
    %c0_i32_1 = arith.constant 0 : i32
    return %c0_i32, %c0_i32_0 : i32, i32
  }
  func.func @transform_4(%arg0: i32) -> (i32, i32) {
    %c0_i32 = arith.constant 0 : i32
    %c0_i32_0 = arith.constant 0 : i32
    %c0_i32_1 = arith.constant 0 : i32
    return %c0_i32, %c0_i32_0 : i32, i32
  }
  func.func @transform_5(%arg0: i32) -> (i32, i32) {
    %c0_i32 = arith.constant 0 : i32
    %c0_i32_0 = arith.constant 0 : i32
    %c0_i32_1 = arith.constant 0 : i32
    return %c0_i32, %c0_i32_0 : i32, i32
  }
  func.func @transform_6(%arg0: i32) -> (i32, i32) {
    %c0_i32 = arith.constant 0 : i32
    %c0_i32_0 = arith.constant 0 : i32
    %c0_i32_1 = arith.constant 0 : i32
    return %c0_i32, %c0_i32_0 : i32, i32
  }
  func.func @transform_7(%arg0: i32) -> (i32, i32) {
    %c0_i32 = arith.constant 0 : i32
    %c0_i32_0 = arith.constant 0 : i32
    %c0_i32_1 = arith.constant 0 : i32
    return %c0_i32, %c0_i32_0 : i32, i32
  }
  func.func @transform_8(%arg0: i32) -> (i32, i32, i32) {
    %c0_i32 = arith.constant 0 : i32
    %c0_i32_0 = arith.constant 0 : i32
    %c0_i32_1 = arith.constant 0 : i32
    return %arg0, %c0_i32, %c0_i32_0 : i32, i32, i32
  }
}

</mosaic_0001>

<llo_original>
// kernel: decoder_block_forward.1
$region0: #{decoder_block_forward.1}
  #allocation0 [shape = 'u32[]', space=smem, size = 0x4, offset = 0x4, fixed_abs, tag = 'smem constant byte address 0x4 - core index']
  #allocation1 [shape = 'u32[72,128]{1,0:T(1,128)}', space=vmem, size = 0x9000, scoped, tag = 'internal scratch']
  %s0 = inlined_call_operand.vmem [shape: f32[2,8,1024], index: 0, kind: input, shape index: {}]
  %s1 = inlined_call_operand.vmem [shape: f32[2,1024], index: 1, kind: input, shape index: {}]
  %s2 = inlined_call_operand.vmem [shape: f32[8,72], index: 2, kind: input, shape index: {}]
  %s3 = inlined_call_operand.vmem [shape: f32[8,1], index: 3, kind: input, shape index: {}]
  %s4 = inlined_call_operand.vmem [shape: f32[8,1], index: 4, kind: input, shape index: {}]
  %s5 = inlined_call_operand.vmem [shape: f32[8,72], index: 5, kind: input, shape index: {}]
  %s6 = inlined_call_operand.vmem [shape: f32[8,1], index: 6, kind: input, shape index: {}]
  %s7 = inlined_call_operand.vmem [shape: f32[8,1], index: 7, kind: input, shape index: {}]
  %s8 = inlined_call_operand.vmem [shape: f32[2,8,1024], index: 8, kind: output, shape index: {}]
  %s9 = sld [smem:[#allocation0]]
  $region65: #{decoder_block_forward.1} parent=0
    _
  %s11 = ssub.s32 1, %s9
  %s12 = scalar_select 0, %s11, %s9
  loop: start=0, step=1, limit=4
  $region2: #{decoder_block_forward.1} parent=0 // loop_pre_header
    _
  $region3: #{decoder_block_forward.1} parent=0 // loop_header
    %s14 = sphi 0, %s18
    %p15 = scmp.ge.s32.totalorder %s14, 4
    %s24 = sphi 0, %s26
    %s27 = sphi 0, %s24
    %s28 = sphi 0, %s27
    %s44 = sphi 0, %s28
    %s48 = sphi 0, %s48
    %s50 = sphi 0, %s48
    %s51 = sphi 0, %s50
    %s65 = sphi 0, %s51
    %s69 = sphi 0, %s69
    %s71 = sphi 0, %s69
    %s72 = sphi 0, %s71
    %s86 = sphi 0, %s72
    %s90 = sphi 0, %s90
    %s92 = sphi 0, %s90
    %s93 = sphi 0, %s92
    %s107 = sphi 0, %s93
    %s111 = sphi 0, %s111
    %s113 = sphi 0, %s111
    %s114 = sphi 0, %s113
    %s128 = sphi 0, %s114
    %s132 = sphi 0, %s132
    %s134 = sphi 0, %s132
    %s135 = sphi 0, %s134
    %s149 = sphi 0, %s135
    %s153 = sphi 0, %s153
    %s155 = sphi 0, %s153
    %s156 = sphi 0, %s155
    %s170 = sphi 0, %s156
    %s174 = sphi 0, %s174
    %s176 = sphi 0, %s174
    %s177 = sphi 0, %s176
    %s191 = sphi 0, %s177
    %s197 = sphi 0, %s199
    %s200 = sphi 0, %s197
    %s201 = sphi 0, %s200
    %s217 = sphi 0, %s201
  $region4: #{decoder_block_forward.1} parent=0 // loop_header_branch
    %17 = sbr.rel (%p15) target = $region8
  $region5: #{decoder_block_forward.1} parent=0 // loop_body
    %s19 = ssub.s32 %s14, 1
    %s20 = ssub.s32 %s14, 2
    %s21 = sadd.s32 %s14, 1
    %s22 = ssub.s32 %s14, %s21
    %p23 = scmp.eq.s32.totalorder %s22, 0
    %s25 = sadd.s32 %s24, 1
    %s26 = scalar_select %p23, %s24, %s25
    %p29 = pneg %p23
    %p30 = scmp.eq.s32.totalorder %s14, 1
    %p31 = por %p29, %p30
    %p32 = scmp.ne.s32.totalorder %s24, %s27
    %p33 = scmp.eq.s32.totalorder %s14, 0
    %p34 = por %p32, %p33
    %p35 = scmp.ne.s32.totalorder %s24, %s27
    %p36 = scmp.eq.s32.totalorder %s19, 1
    %p37 = por %p35, %p36
    %p38 = scmp.ne.s32.totalorder %s27, %s28
    %p39 = scmp.eq.s32.totalorder %s19, 0
    %p40 = por %p38, %p39
    %p41 = scmp.ne.s32.totalorder %s27, %s28
    %p42 = scmp.eq.s32.totalorder %s20, 1
    %p43 = por %p41, %p42
    %p45 = scmp.ne.s32.totalorder %s28, %s44
    %p46 = scmp.eq.s32.totalorder %s20, 0
    %p47 = por %p45, %p46
    %s49 = sadd.s32 %s48, 1
    %p52 = scmp.eq.s32.totalorder %s14, 1
    %p53 = scmp.ne.s32.totalorder %s48, %s50
    %p54 = scmp.eq.s32.totalorder %s14, 0
    %p55 = por %p53, %p54
    %p56 = scmp.ne.s32.totalorder %s48, %s50
    %p57 = scmp.eq.s32.totalorder %s19, 1
    %p58 = por %p56, %p57
    %p59 = scmp.ne.s32.totalorder %s50, %s51
    %p60 = scmp.eq.s32.totalorder %s19, 0
    %p61 = por %p59, %p60
    %p62 = scmp.ne.s32.totalorder %s50, %s51
    %p63 = scmp.eq.s32.totalorder %s20, 1
    %p64 = por %p62, %p63
    %p66 = scmp.ne.s32.totalorder %s51, %s65
    %p67 = scmp.eq.s32.totalorder %s20, 0
    %p68 = por %p66, %p67
    %s70 = sadd.s32 %s69, 1
    %p73 = scmp.eq.s32.totalorder %s14, 1
    %p74 = scmp.ne.s32.totalorder %s69, %s71
    %p75 = scmp.eq.s32.totalorder %s14, 0
    %p76 = por %p74, %p75
    %p77 = scmp.ne.s32.totalorder %s69, %s71
    %p78 = scmp.eq.s32.totalorder %s19, 1
    %p79 = por %p77, %p78
    %p80 = scmp.ne.s32.totalorder %s71, %s72
    %p81 = scmp.eq.s32.totalorder %s19, 0
    %p82 = por %p80, %p81
    %p83 = scmp.ne.s32.totalorder %s71, %s72
    %p84 = scmp.eq.s32.totalorder %s20, 1
    %p85 = por %p83, %p84
    %p87 = scmp.ne.s32.totalorder %s72, %s86
    %p88 = scmp.eq.s32.totalorder %s20, 0
    %p89 = por %p87, %p88
    %s91 = sadd.s32 %s90, 1
    %p94 = scmp.eq.s32.totalorder %s14, 1
    %p95 = scmp.ne.s32.totalorder %s90, %s92
    %p96 = scmp.eq.s32.totalorder %s14, 0
    %p97 = por %p95, %p96
    %p98 = scmp.ne.s32.totalorder %s90, %s92
    %p99 = scmp.eq.s32.totalorder %s19, 1
    %p100 = por %p98, %p99
    %p101 = scmp.ne.s32.totalorder %s92, %s93
    %p102 = scmp.eq.s32.totalorder %s19, 0
    %p103 = por %p101, %p102
    %p104 = scmp.ne.s32.totalorder %s92, %s93
    %p105 = scmp.eq.s32.totalorder %s20, 1
    %p106 = por %p104, %p105
    %p108 = scmp.ne.s32.totalorder %s93, %s107
    %p109 = scmp.eq.s32.totalorder %s20, 0
    %p110 = por %p108, %p109
    %s112 = sadd.s32 %s111, 1
    %p115 = scmp.eq.s32.totalorder %s14, 1
    %p116 = scmp.ne.s32.totalorder %s111, %s113
    %p117 = scmp.eq.s32.totalorder %s14, 0
    %p118 = por %p116, %p117
    %p119 = scmp.ne.s32.totalorder %s111, %s113
    %p120 = scmp.eq.s32.totalorder %s19, 1
    %p121 = por %p119, %p120
    %p122 = scmp.ne.s32.totalorder %s113, %s114
    %p123 = scmp.eq.s32.totalorder %s19, 0
    %p124 = por %p122, %p123
    %p125 = scmp.ne.s32.totalorder %s113, %s114
    %p126 = scmp.eq.s32.totalorder %s20, 1
    %p127 = por %p125, %p126
    %p129 = scmp.ne.s32.totalorder %s114, %s128
    %p130 = scmp.eq.s32.totalorder %s20, 0
    %p131 = por %p129, %p130
    %s133 = sadd.s32 %s132, 1
    %p136 = scmp.eq.s32.totalorder %s14, 1
    %p137 = scmp.ne.s32.totalorder %s132, %s134
    %p138 = scmp.eq.s32.totalorder %s14, 0
    %p139 = por %p137, %p138
    %p140 = scmp.ne.s32.totalorder %s132, %s134
    %p141 = scmp.eq.s32.totalorder %s19, 1
    %p142 = por %p140, %p141
    %p143 = scmp.ne.s32.totalorder %s134, %s135
    %p144 = scmp.eq.s32.totalorder %s19, 0
    %p145 = por %p143, %p144
    %p146 = scmp.ne.s32.totalorder %s134, %s135
    %p147 = scmp.eq.s32.totalorder %s20, 1
    %p148 = por %p146, %p147
    %p150 = scmp.ne.s32.totalorder %s135, %s149
    %p151 = scmp.eq.s32.totalorder %s20, 0
    %p152 = por %p150, %p151
    %s154 = sadd.s32 %s153, 1
    %p157 = scmp.eq.s32.totalorder %s14, 1
    %p158 = scmp.ne.s32.totalorder %s153, %s155
    %p159 = scmp.eq.s32.totalorder %s14, 0
    %p160 = por %p158, %p159
    %p161 = scmp.ne.s32.totalorder %s153, %s155
    %p162 = scmp.eq.s32.totalorder %s19, 1
    %p163 = por %p161, %p162
    %p164 = scmp.ne.s32.totalorder %s155, %s156
    %p165 = scmp.eq.s32.totalorder %s19, 0
    %p166 = por %p164, %p165
    %p167 = scmp.ne.s32.totalorder %s155, %s156
    %p168 = scmp.eq.s32.totalorder %s20, 1
    %p169 = por %p167, %p168
    %p171 = scmp.ne.s32.totalorder %s156, %s170
    %p172 = scmp.eq.s32.totalorder %s20, 0
    %p173 = por %p171, %p172
    %s175 = sadd.s32 %s174, 1
    %p178 = scmp.eq.s32.totalorder %s14, 1
    %p179 = scmp.ne.s32.totalorder %s174, %s176
    %p180 = scmp.eq.s32.totalorder %s14, 0
    %p181 = por %p179, %p180
    %p182 = scmp.ne.s32.totalorder %s174, %s176
    %p183 = scmp.eq.s32.totalorder %s19, 1
    %p184 = por %p182, %p183
    %p185 = scmp.ne.s32.totalorder %s176, %s177
    %p186 = scmp.eq.s32.totalorder %s19, 0
    %p187 = por %p185, %p186
    %p188 = scmp.ne.s32.totalorder %s176, %s177
    %p189 = scmp.eq.s32.totalorder %s20, 1
    %p190 = por %p188, %p189
    %p192 = scmp.ne.s32.totalorder %s177, %s191
    %p193 = scmp.eq.s32.totalorder %s20, 0
    %p194 = por %p192, %p193
    %s195 = ssub.s32 %s14, %s21
    %p196 = scmp.eq.s32.totalorder %s195, 0
    %s198 = sadd.s32 %s197, 1
    %s199 = scalar_select %p196, %s197, %s198
    %p202 = pneg %p196
    %p203 = scmp.eq.s32.totalorder %s14, 1
    %p204 = por %p202, %p203
    %p205 = scmp.ne.s32.totalorder %s197, %s200
    %p206 = scmp.eq.s32.totalorder %s14, 0
    %p207 = por %p205, %p206
    %p208 = scmp.ne.s32.totalorder %s197, %s200
    %p209 = scmp.eq.s32.totalorder %s19, 1
    %p210 = por %p208, %p209
    %p211 = scmp.ne.s32.totalorder %s200, %s201
    %p212 = scmp.eq.s32.totalorder %s19, 0
    %p213 = por %p211, %p212
    %p214 = scmp.ne.s32.totalorder %s200, %s201
    %p215 = scmp.eq.s32.totalorder %s20, 1
    %p216 = por %p214, %p215
    %p218 = scmp.ne.s32.totalorder %s201, %s217
    %p219 = scmp.eq.s32.totalorder %s20, 0
    %p220 = por %p218, %p219
    %p221 = scmp.le.s32.totalorder 1, %s14
    %p222 = scmp.lt.s32.totalorder %s14, 3
    %p223 = pnand %p221, %p222
    %p224 = pneg %p223
    // Predicated region
    $region9: #{decoder_block_forward.1} parent=5 // pred_check
      _
    $region10: #{decoder_block_forward.1} parent=5 // pred_check_branch
      %226 = sbr.rel (%p223) target = $region12
    $region11: #{decoder_block_forward.1} parent=5 // pred_region
      %s227 = ssub.s32 %s14, 1
      // Predicated region
      $region13: #{decoder_block_forward.1} parent=11 // pred_check
        %p228 = pneg %p61
      $region14: #{decoder_block_forward.1} parent=11 // pred_check_branch
        %230 = sbr.rel (%p228) target = $region16
      $region15: #{decoder_block_forward.1} parent=11 // pred_region
        _
      $region16: #{decoder_block_forward.1} parent=11 // pred_fallthru
        _
      // Predicated region
      $region17: #{decoder_block_forward.1} parent=11 // pred_check
        %p231 = pneg %p82
      $region18: #{decoder_block_forward.1} parent=11 // pred_check_branch
        %233 = sbr.rel (%p231) target = $region20
      $region19: #{decoder_block_forward.1} parent=11 // pred_region
        _
      $region20: #{decoder_block_forward.1} parent=11 // pred_fallthru
        _
      // Predicated region
      $region21: #{decoder_block_forward.1} parent=11 // pred_check
        %p234 = pneg %p103
      $region22: #{decoder_block_forward.1} parent=11 // pred_check_branch
        %236 = sbr.rel (%p234) target = $region24
      $region23: #{decoder_block_forward.1} parent=11 // pred_region
        _
      $region24: #{decoder_block_forward.1} parent=11 // pred_fallthru
        _
      // Predicated region
      $region25: #{decoder_block_forward.1} parent=11 // pred_check
        %p237 = pneg %p124
      $region26: #{decoder_block_forward.1} parent=11 // pred_check_branch
        %239 = sbr.rel (%p237) target = $region28
      $region27: #{decoder_block_forward.1} parent=11 // pred_region
        _
      $region28: #{decoder_block_forward.1} parent=11 // pred_fallthru
        _
      // Predicated region
      $region29: #{decoder_block_forward.1} parent=11 // pred_check
        %p240 = pneg %p145
      $region30: #{decoder_block_forward.1} parent=11 // pred_check_branch
        %242 = sbr.rel (%p240) target = $region32
      $region31: #{decoder_block_forward.1} parent=11 // pred_region
        _
      $region32: #{decoder_block_forward.1} parent=11 // pred_fallthru
        _
      // Predicated region
      $region33: #{decoder_block_forward.1} parent=11 // pred_check
        %p243 = pneg %p166
      $region34: #{decoder_block_forward.1} parent=11 // pred_check_branch
        %245 = sbr.rel (%p243) target = $region36
      $region35: #{decoder_block_forward.1} parent=11 // pred_region
        _
      $region36: #{decoder_block_forward.1} parent=11 // pred_fallthru
        _
      // Predicated region
      $region37: #{decoder_block_forward.1} parent=11 // pred_check
        %p246 = pneg %p187
      $region38: #{decoder_block_forward.1} parent=11 // pred_check_branch
        %248 = sbr.rel (%p246) target = $region40
      $region39: #{decoder_block_forward.1} parent=11 // pred_region
        _
      $region40: #{decoder_block_forward.1} parent=11 // pred_fallthru
        _
    $region12: #{decoder_block_forward.1} parent=5 // pred_fallthru
      _
    %p249 = scmp.lt.s32.totalorder %s14, 2
    // Predicated region
    $region41: #{decoder_block_forward.1} parent=5 // pred_check
      %p250 = pneg %p249
    $region42: #{decoder_block_forward.1} parent=5 // pred_check_branch
      %252 = sbr.rel (%p250) target = $region44
    $region43: #{decoder_block_forward.1} parent=5 // pred_region
      // Predicated region
      $region45: #{decoder_block_forward.1} parent=43 // pred_check
        %p253 = pneg %p34
      $region46: #{decoder_block_forward.1} parent=43 // pred_check_branch
        %255 = sbr.rel (%p253) target = $region48
      $region47: #{decoder_block_forward.1} parent=43 // pred_region
        %p256 = scmp.lt.s32.totalorder %s14, 1
        %s257 = scalar_select %p256, %s14, 1
        %s258 = smul.addr %s257, 8
        %s259 = smul.addr %s258, 8
        %s260 = scalar_lea.vmem %s0, %s259
      $region48: #{decoder_block_forward.1} parent=43 // pred_fallthru
        _
    $region44: #{decoder_block_forward.1} parent=5 // pred_fallthru
      _
    %p261 = scmp.le.s32.totalorder 1, %s14
    %p262 = scmp.lt.s32.totalorder %s14, 3
    %p263 = pnand %p261, %p262
    %p264 = pneg %p263
    // Predicated region
    $region49: #{decoder_block_forward.1} parent=5 // pred_check
      _
    $region50: #{decoder_block_forward.1} parent=5 // pred_check_branch
      %266 = sbr.rel (%p263) target = $region52
    $region51: #{decoder_block_forward.1} parent=5 // pred_region
      %s267 = ssub.s32 %s14, 1
      %p268 = scmp.lt.s32.totalorder %s19, 1
      %s269 = scalar_select %p268, %s19, 1
      %s270 = smul.addr %s269, 8
      %s271 = smul.addr %s270, 8
      %s272 = scalar_lea.vmem %s0, %s271
      %p273 = pneg %p40
      %p274 = pneg %p37
      %p275 = pneg %p61
      %p276 = pneg %p58
      %p277 = pneg %p82
      %p278 = pneg %p79
      %p279 = pneg %p103
      %p280 = pneg %p100
      %p281 = pneg %p124
      %p282 = pneg %p121
      %p283 = pneg %p145
      %p284 = pneg %p142
      %p285 = pneg %p166
      %p286 = pneg %p163
      %p287 = pneg %p187
      %p288 = pneg %p184
      %p289 = pneg %p213
      %p290 = pneg %p210
      %p291 = scmp.lt.s32.totalorder %s19, 1
      %s292 = scalar_select %p291, %s19, 1
      %s293 = smul.addr %s292, 8
      %s294 = smul.addr %s293, 8
      %s295 = scalar_lea.vmem %s8, %s294
      %p296 = scmp.lt.s32.totalorder %s19, 1
      %s297 = scalar_select %p296, %s19, 1
      %s298 = smul.addr %s297, 8
      %s299 = smul.addr %s298, 8
      %s300 = scalar_lea.vmem %s0, %s299
      %p301 = scmp.lt.s32.totalorder %s19, 1
      %s302 = scalar_select %p301, %s19, 1
      %s303 = smul.addr %s302, 8
      %s304 = smul.addr %s303, 8
      %s305 = scalar_lea.vmem %s8, %s304
      %v306 = vld [vmem:[%s300] sm:$0xff]
      %v307 = vld [vmem:[%s300 + $0x8] sm:$0xff]
      %v308 = vld [vmem:[%s300 + $0x10] sm:$0xff]
      %v309 = vld [vmem:[%s300 + $0x18] sm:$0xff]
      %v310 = vld [vmem:[%s300 + $0x20] sm:$0xff]
      %v311 = vld [vmem:[%s300 + $0x28] sm:$0xff]
      %v312 = vld [vmem:[%s300 + $0x30] sm:$0xff]
      %v313 = vld [vmem:[%s300 + $0x38] sm:$0xff]
      %v314 = vld [vmem:[%s1] sm:$0xff]
      %v315 = vld [vmem:[%s1 + $0x8] sm:$0xff]
      %v316 = vld [vmem:[%s2] sm:$0xff]
      %325 = vrot.lane.b32.xlu0 %v306, 33
      %v326 = vpop.permute.xlu0 %325
      %327 = vrot.lane.b32.xlu0 %v307, 33
      %v328 = vpop.permute.xlu0 %327
      %329 = vrot.lane.b32.xlu0 %v308, 33
      %v330 = vpop.permute.xlu0 %329
      %331 = vrot.lane.b32.xlu0 %v309, 33
      %v332 = vpop.permute.xlu0 %331
      %333 = vrot.lane.b32.xlu0 %v310, 33
      %v334 = vpop.permute.xlu0 %333
      %335 = vrot.lane.b32.xlu0 %v311, 33
      %v336 = vpop.permute.xlu0 %335
      %337 = vrot.lane.b32.xlu0 %v312, 33
      %v338 = vpop.permute.xlu0 %337
      %339 = vrot.lane.b32.xlu0 %v313, 33
      %v340 = vpop.permute.xlu0 %339
      %vm341 = vcmask 269312
      %v342 = vsel %vm341, %v326, %v328
      %v343 = vsel %vm341, %v328, %v330
      %v344 = vsel %vm341, %v330, %v332
      %v345 = vsel %vm341, %v332, %v334
      %v346 = vsel %vm341, %v334, %v336
      %v347 = vsel %vm341, %v336, %v338
      %v348 = vsel %vm341, %v338, %v340
      %v358 = vsel %vm341, 0.0, %v326
      %v359 = vsel %vm341, %v340, 0.0
      %v362 = vperm.slane %v314, 0
      %v363 = vperm.slane %v314, 2
      %v364 = vperm.slane %v314, 4
      %v365 = vperm.slane %v314, 6
      %v366 = vperm.slane %v315, 0
      %v367 = vperm.slane %v315, 2
      %v368 = vperm.slane %v315, 4
      %v369 = vperm.slane %v315, 6
      %v378 = vperm.slane %v362, 0
      %v379 = vperm.slane %v363, 0
      %v380 = vperm.slane %v364, 0
      %v381 = vperm.slane %v365, 0
      %v382 = vperm.slane %v366, 0
      %v383 = vperm.slane %v367, 0
      %v384 = vperm.slane %v368, 0
      %v385 = vperm.slane %v369, 0
      %v386 = vmul.f32 %v358, %v378
      %v387 = vmul.f32 %v342, %v379
      %v388 = vmul.f32 %v343, %v380
      %v389 = vmul.f32 %v344, %v381
      %v390 = vmul.f32 %v345, %v382
      %v391 = vmul.f32 %v346, %v383
      %v392 = vmul.f32 %v347, %v384
      %v393 = vmul.f32 %v348, %v385
      %v394 = vperm.slane %v314, 1
      %v395 = vperm.slane %v314, 3
      %v396 = vperm.slane %v314, 5
      %v397 = vperm.slane %v314, 7
      %v398 = vperm.slane %v315, 1
      %v399 = vperm.slane %v315, 3
      %v400 = vperm.slane %v315, 5
      %v401 = vperm.slane %v315, 7
      %v410 = vperm.slane %v394, 1
      %v411 = vperm.slane %v395, 1
      %v412 = vperm.slane %v396, 1
      %v413 = vperm.slane %v397, 1
      %v414 = vperm.slane %v398, 1
      %v415 = vperm.slane %v399, 1
      %v416 = vperm.slane %v400, 1
      %v417 = vperm.slane %v401, 1
      %426 = vrot.lane.b32.xlu0 %v410, 2
      %v427 = vpop.permute.xlu0 %426
      %428 = vrot.lane.b32.xlu0 %v411, 2
      %v429 = vpop.permute.xlu0 %428
      %430 = vrot.lane.b32.xlu0 %v412, 2
      %v431 = vpop.permute.xlu0 %430
      %432 = vrot.lane.b32.xlu0 %v413, 2
      %v433 = vpop.permute.xlu0 %432
      %434 = vrot.lane.b32.xlu0 %v414, 2
      %v435 = vpop.permute.xlu0 %434
      %436 = vrot.lane.b32.xlu0 %v415, 2
      %v437 = vpop.permute.xlu0 %436
      %438 = vrot.lane.b32.xlu0 %v416, 2
      %v439 = vpop.permute.xlu0 %438
      %440 = vrot.lane.b32.xlu0 %v417, 2
      %v441 = vpop.permute.xlu0 %440
      %vm442 = vcmask 15360
      %v443 = vsel %vm442, %v427, %v429
      %v444 = vsel %vm442, %v429, %v431
      %v445 = vsel %vm442, %v431, %v433
      %v446 = vsel %vm442, %v433, %v435
      %v447 = vsel %vm442, %v435, %v437
      %v448 = vsel %vm442, %v437, %v439
      %v449 = vsel %vm442, %v439, %v441
      %v459 = vmul.f32 %v358, %v427
      %v460 = vmul.f32 %v342, %v443
      %v461 = vmul.f32 %v343, %v444
      %v462 = vmul.f32 %v344, %v445
      %v463 = vmul.f32 %v345, %v446
      %v464 = vmul.f32 %v346, %v447
      %v465 = vmul.f32 %v347, %v448
      %v466 = vmul.f32 %v348, %v449
      %v467 = vmul.f32 %v359, %v441
      %476 = vrot.lane.b32.xlu0 %v378, 32
      %v477 = vpop.permute.xlu0 %476
      %478 = vrot.lane.b32.xlu0 %v379, 32
      %v479 = vpop.permute.xlu0 %478
      %480 = vrot.lane.b32.xlu0 %v380, 32
      %v481 = vpop.permute.xlu0 %480
      %482 = vrot.lane.b32.xlu0 %v381, 32
      %v483 = vpop.permute.xlu0 %482
      %484 = vrot.lane.b32.xlu0 %v382, 32
      %v485 = vpop.permute.xlu0 %484
      %486 = vrot.lane.b32.xlu0 %v383, 32
      %v487 = vpop.permute.xlu0 %486
      %488 = vrot.lane.b32.xlu0 %v384, 32
      %v489 = vpop.permute.xlu0 %488
      %490 = vrot.lane.b32.xlu0 %v385, 32
      %v491 = vpop.permute.xlu0 %490
      %vm492 = vcmask 261120
      %v493 = vsel %vm492, %v477, %v479
      %v494 = vsel %vm492, %v479, %v481
      %v495 = vsel %vm492, %v481, %v483
      %v496 = vsel %vm492, %v483, %v485
      %v497 = vsel %vm492, %v485, %v487
      %v498 = vsel %vm492, %v487, %v489
      %v499 = vsel %vm492, %v489, %v491
      %v509 = vmul.f32 %v358, %v477
      %v510 = vmul.f32 %v342, %v493
      %v511 = vmul.f32 %v343, %v494
      %v512 = vmul.f32 %v344, %v495
      %v513 = vmul.f32 %v345, %v496
      %v514 = vmul.f32 %v346, %v497
      %v515 = vmul.f32 %v347, %v498
      %v516 = vmul.f32 %v348, %v499
      %v517 = vmul.f32 %v359, %v491
      %518 = vrot.lane.b32.xlu0 %v410, 34
      %v519 = vpop.permute.xlu0 %518
      %520 = vrot.lane.b32.xlu0 %v411, 34
      %v521 = vpop.permute.xlu0 %520
      %522 = vrot.lane.b32.xlu0 %v412, 34
      %v523 = vpop.permute.xlu0 %522
      %524 = vrot.lane.b32.xlu0 %v413, 34
      %v525 = vpop.permute.xlu0 %524
      %526 = vrot.lane.b32.xlu0 %v414, 34
      %v527 = vpop.permute.xlu0 %526
      %528 = vrot.lane.b32.xlu0 %v415, 34
      %v529 = vpop.permute.xlu0 %528
      %530 = vrot.lane.b32.xlu0 %v416, 34
      %v531 = vpop.permute.xlu0 %530
      %532 = vrot.lane.b32.xlu0 %v417, 34
      %v533 = vpop.permute.xlu0 %532
      %vm534 = vcmask 277504
      %v535 = vsel %vm534, %v519, %v521
      %v536 = vsel %vm534, %v521, %v523
      %v537 = vsel %vm534, %v523, %v525
      %v538 = vsel %vm534, %v525, %v527
      %v539 = vsel %vm534, %v527, %v529
      %v540 = vsel %vm534, %v529, %v531
      %v541 = vsel %vm534, %v531, %v533
      %v551 = vmul.f32 %v358, %v519
      %v552 = vmul.f32 %v342, %v535
      %v553 = vmul.f32 %v343, %v536
      %v554 = vmul.f32 %v344, %v537
      %v555 = vmul.f32 %v345, %v538
      %v556 = vmul.f32 %v346, %v539
      %v557 = vmul.f32 %v347, %v540
      %v558 = vmul.f32 %v348, %v541
      %v559 = vmul.f32 %v359, %v533
      %560 = vrot.lane.b32.xlu0 %v378, 64
      %v561 = vpop.permute.xlu0 %560
      %562 = vrot.lane.b32.xlu0 %v379, 64
      %v563 = vpop.permute.xlu0 %562
      %564 = vrot.lane.b32.xlu0 %v380, 64
      %v565 = vpop.permute.xlu0 %564
      %566 = vrot.lane.b32.xlu0 %v381, 64
      %v567 = vpop.permute.xlu0 %566
      %568 = vrot.lane.b32.xlu0 %v382, 64
      %v569 = vpop.permute.xlu0 %568
      %570 = vrot.lane.b32.xlu0 %v383, 64
      %v571 = vpop.permute.xlu0 %570
      %572 = vrot.lane.b32.xlu0 %v384, 64
      %v573 = vpop.permute.xlu0 %572
      %574 = vrot.lane.b32.xlu0 %v385, 64
      %v575 = vpop.permute.xlu0 %574
      %vm576 = vcmask 523264
      %v577 = vsel %vm576, %v561, %v563
      %v578 = vsel %vm576, %v563, %v565
      %v579 = vsel %vm576, %v565, %v567
      %v580 = vsel %vm576, %v567, %v569
      %v581 = vsel %vm576, %v569, %v571
      %v582 = vsel %vm576, %v571, %v573
      %v583 = vsel %vm576, %v573, %v575
      %v593 = vmul.f32 %v358, %v561
      %v594 = vmul.f32 %v342, %v577
      %v595 = vmul.f32 %v343, %v578
      %v596 = vmul.f32 %v344, %v579
      %v597 = vmul.f32 %v345, %v580
      %v598 = vmul.f32 %v346, %v581
      %v599 = vmul.f32 %v347, %v582
      %v600 = vmul.f32 %v348, %v583
      %v601 = vmul.f32 %v359, %v575
      %602 = vrot.lane.b32.xlu0 %v410, 66
      %v603 = vpop.permute.xlu0 %602
      %604 = vrot.lane.b32.xlu0 %v411, 66
      %v605 = vpop.permute.xlu0 %604
      %606 = vrot.lane.b32.xlu0 %v412, 66
      %v607 = vpop.permute.xlu0 %606
      %608 = vrot.lane.b32.xlu0 %v413, 66
      %v609 = vpop.permute.xlu0 %608
      %610 = vrot.lane.b32.xlu0 %v414, 66
      %v611 = vpop.permute.xlu0 %610
      %612 = vrot.lane.b32.xlu0 %v415, 66
      %v613 = vpop.permute.xlu0 %612
      %614 = vrot.lane.b32.xlu0 %v416, 66
      %v615 = vpop.permute.xlu0 %614
      %616 = vrot.lane.b32.xlu0 %v417, 66
      %v617 = vpop.permute.xlu0 %616
      %vm618 = vcmask 539648
      %v619 = vsel %vm618, %v603, %v605
      %v620 = vsel %vm618, %v605, %v607
      %v621 = vsel %vm618, %v607, %v609
      %v622 = vsel %vm618, %v609, %v611
      %v623 = vsel %vm618, %v611, %v613
      %v624 = vsel %vm618, %v613, %v615
      %v625 = vsel %vm618, %v615, %v617
      %v635 = vmul.f32 %v358, %v603
      %v636 = vmul.f32 %v342, %v619
      %v637 = vmul.f32 %v343, %v620
      %v638 = vmul.f32 %v344, %v621
      %v639 = vmul.f32 %v345, %v622
      %v640 = vmul.f32 %v346, %v623
      %v641 = vmul.f32 %v347, %v624
      %v642 = vmul.f32 %v348, %v625
      %v643 = vmul.f32 %v359, %v617
      %646 = vrot.lane.b32.xlu0 %v358, 127
      %v647 = vpop.permute.xlu0 %646
      %648 = vrot.lane.b32.xlu0 %v342, 127
      %v649 = vpop.permute.xlu0 %648
      %650 = vrot.lane.b32.xlu0 %v343, 127
      %v651 = vpop.permute.xlu0 %650
      %652 = vrot.lane.b32.xlu0 %v344, 127
      %v653 = vpop.permute.xlu0 %652
      %654 = vrot.lane.b32.xlu0 %v345, 127
      %v655 = vpop.permute.xlu0 %654
      %656 = vrot.lane.b32.xlu0 %v346, 127
      %v657 = vpop.permute.xlu0 %656
      %658 = vrot.lane.b32.xlu0 %v347, 127
      %v659 = vpop.permute.xlu0 %658
      %660 = vrot.lane.b32.xlu0 %v348, 127
      %v661 = vpop.permute.xlu0 %660
      %662 = vrot.lane.b32.xlu0 %v359, 127
      %v663 = vpop.permute.xlu0 %662
      %vm664 = vcmask 1039360
      %v665 = vsel %vm664, %v647, %v649
      %v666 = vsel %vm664, %v649, %v651
      %v667 = vsel %vm664, %v651, %v653
      %v668 = vsel %vm664, %v653, %v655
      %v669 = vsel %vm664, %v655, %v657
      %v670 = vsel %vm664, %v657, %v659
      %v671 = vsel %vm664, %v659, %v661
      %v672 = vsel %vm664, %v661, %v663
      %690 = vrot.lane.b32.xlu0 %v459, 126
      %v691 = vpop.permute.xlu0 %690
      %692 = vrot.lane.b32.xlu0 %v460, 126
      %v693 = vpop.permute.xlu0 %692
      %694 = vrot.lane.b32.xlu0 %v461, 126
      %v695 = vpop.permute.xlu0 %694
      %696 = vrot.lane.b32.xlu0 %v462, 126
      %v697 = vpop.permute.xlu0 %696
      %698 = vrot.lane.b32.xlu0 %v463, 126
      %v699 = vpop.permute.xlu0 %698
      %700 = vrot.lane.b32.xlu0 %v464, 126
      %v701 = vpop.permute.xlu0 %700
      %702 = vrot.lane.b32.xlu0 %v465, 126
      %v703 = vpop.permute.xlu0 %702
      %704 = vrot.lane.b32.xlu0 %v466, 126
      %v705 = vpop.permute.xlu0 %704
      %706 = vrot.lane.b32.xlu0 %v467, 126
      %v707 = vpop.permute.xlu0 %706
      %vm708 = vcmask 1031168
      %v709 = vsel %vm708, %v691, %v693
      %v710 = vsel %vm708, %v693, %v695
      %v711 = vsel %vm708, %v695, %v697
      %v712 = vsel %vm708, %v697, %v699
      %v713 = vsel %vm708, %v699, %v701
      %v714 = vsel %vm708, %v701, %v703
      %v715 = vsel %vm708, %v703, %v705
      %v716 = vsel %vm708, %v705, %v707
      %734 = vrot.lane.b32.xlu0 %v509, 96
      %v735 = vpop.permute.xlu0 %734
      %736 = vrot.lane.b32.xlu0 %v510, 96
      %v737 = vpop.permute.xlu0 %736
      %738 = vrot.lane.b32.xlu0 %v511, 96
      %v739 = vpop.permute.xlu0 %738
      %740 = vrot.lane.b32.xlu0 %v512, 96
      %v741 = vpop.permute.xlu0 %740
      %742 = vrot.lane.b32.xlu0 %v513, 96
      %v743 = vpop.permute.xlu0 %742
      %744 = vrot.lane.b32.xlu0 %v514, 96
      %v745 = vpop.permute.xlu0 %744
      %746 = vrot.lane.b32.xlu0 %v515, 96
      %v747 = vpop.permute.xlu0 %746
      %748 = vrot.lane.b32.xlu0 %v516, 96
      %v749 = vpop.permute.xlu0 %748
      %750 = vrot.lane.b32.xlu0 %v517, 96
      %v751 = vpop.permute.xlu0 %750
      %vm752 = vcmask 785408
      %v753 = vsel %vm752, %v735, %v737
      %v754 = vsel %vm752, %v737, %v739
      %v755 = vsel %vm752, %v739, %v741
      %v756 = vsel %vm752, %v741, %v743
      %v757 = vsel %vm752, %v743, %v745
      %v758 = vsel %vm752, %v745, %v747
      %v759 = vsel %vm752, %v747, %v749
      %v760 = vsel %vm752, %v749, %v751
      %769 = vrot.lane.b32.xlu0 %v358, 95
      %v770 = vpop.permute.xlu0 %769
      %771 = vrot.lane.b32.xlu0 %v342, 95
      %v772 = vpop.permute.xlu0 %771
      %773 = vrot.lane.b32.xlu0 %v343, 95
      %v774 = vpop.permute.xlu0 %773
      %775 = vrot.lane.b32.xlu0 %v344, 95
      %v776 = vpop.permute.xlu0 %775
      %777 = vrot.lane.b32.xlu0 %v345, 95
      %v778 = vpop.permute.xlu0 %777
      %779 = vrot.lane.b32.xlu0 %v346, 95
      %v780 = vpop.permute.xlu0 %779
      %781 = vrot.lane.b32.xlu0 %v347, 95
      %v782 = vpop.permute.xlu0 %781
      %783 = vrot.lane.b32.xlu0 %v348, 95
      %v784 = vpop.permute.xlu0 %783
      %785 = vrot.lane.b32.xlu0 %v359, 95
      %v786 = vpop.permute.xlu0 %785
      %vm787 = vcmask 777216
      %v788 = vsel %vm787, %v770, %v772
      %v789 = vsel %vm787, %v772, %v774
      %v790 = vsel %vm787, %v774, %v776
      %v791 = vsel %vm787, %v776, %v778
      %v792 = vsel %vm787, %v778, %v780
      %v793 = vsel %vm787, %v780, %v782
      %v794 = vsel %vm787, %v782, %v784
      %v795 = vsel %vm787, %v784, %v786
      %813 = vrot.lane.b32.xlu0 %v551, 94
      %v814 = vpop.permute.xlu0 %813
      %815 = vrot.lane.b32.xlu0 %v552, 94
      %v816 = vpop.permute.xlu0 %815
      %817 = vrot.lane.b32.xlu0 %v553, 94
      %v818 = vpop.permute.xlu0 %817
      %819 = vrot.lane.b32.xlu0 %v554, 94
      %v820 = vpop.permute.xlu0 %819
      %821 = vrot.lane.b32.xlu0 %v555, 94
      %v822 = vpop.permute.xlu0 %821
      %823 = vrot.lane.b32.xlu0 %v556, 94
      %v824 = vpop.permute.xlu0 %823
      %825 = vrot.lane.b32.xlu0 %v557, 94
      %v826 = vpop.permute.xlu0 %825
      %827 = vrot.lane.b32.xlu0 %v558, 94
      %v828 = vpop.permute.xlu0 %827
      %829 = vrot.lane.b32.xlu0 %v559, 94
      %v830 = vpop.permute.xlu0 %829
      %vm831 = vcmask 769024
      %v832 = vsel %vm831, %v814, %v816
      %v833 = vsel %vm831, %v816, %v818
      %v834 = vsel %vm831, %v818, %v820
      %v835 = vsel %vm831, %v820, %v822
      %v836 = vsel %vm831, %v822, %v824
      %v837 = vsel %vm831, %v824, %v826
      %v838 = vsel %vm831, %v826, %v828
      %v839 = vsel %vm831, %v828, %v830
      %857 = vrot.lane.b32.xlu0 %v593, 64
      %v858 = vpop.permute.xlu0 %857
      %859 = vrot.lane.b32.xlu0 %v594, 64
      %v860 = vpop.permute.xlu0 %859
      %861 = vrot.lane.b32.xlu0 %v595, 64
      %v862 = vpop.permute.xlu0 %861
      %863 = vrot.lane.b32.xlu0 %v596, 64
      %v864 = vpop.permute.xlu0 %863
      %865 = vrot.lane.b32.xlu0 %v597, 64
      %v866 = vpop.permute.xlu0 %865
      %867 = vrot.lane.b32.xlu0 %v598, 64
      %v868 = vpop.permute.xlu0 %867
      %869 = vrot.lane.b32.xlu0 %v599, 64
      %v870 = vpop.permute.xlu0 %869
      %871 = vrot.lane.b32.xlu0 %v600, 64
      %v872 = vpop.permute.xlu0 %871
      %873 = vrot.lane.b32.xlu0 %v601, 64
      %v874 = vpop.permute.xlu0 %873
      %v875 = vsel %vm576, %v858, %v860
      %v876 = vsel %vm576, %v860, %v862
      %v877 = vsel %vm576, %v862, %v864
      %v878 = vsel %vm576, %v864, %v866
      %v879 = vsel %vm576, %v866, %v868
      %v880 = vsel %vm576, %v868, %v870
      %v881 = vsel %vm576, %v870, %v872
      %v882 = vsel %vm576, %v872, %v874
      %891 = vrot.lane.b32.xlu0 %v358, 63
      %v892 = vpop.permute.xlu0 %891
      %893 = vrot.lane.b32.xlu0 %v342, 63
      %v894 = vpop.permute.xlu0 %893
      %895 = vrot.lane.b32.xlu0 %v343, 63
      %v896 = vpop.permute.xlu0 %895
      %897 = vrot.lane.b32.xlu0 %v344, 63
      %v898 = vpop.permute.xlu0 %897
      %899 = vrot.lane.b32.xlu0 %v345, 63
      %v900 = vpop.permute.xlu0 %899
      %901 = vrot.lane.b32.xlu0 %v346, 63
      %v902 = vpop.permute.xlu0 %901
      %903 = vrot.lane.b32.xlu0 %v347, 63
      %v904 = vpop.permute.xlu0 %903
      %905 = vrot.lane.b32.xlu0 %v348, 63
      %v906 = vpop.permute.xlu0 %905
      %907 = vrot.lane.b32.xlu0 %v359, 63
      %v908 = vpop.permute.xlu0 %907
      %vm909 = vcmask 515072
      %v910 = vsel %vm909, %v892, %v894
      %v911 = vsel %vm909, %v894, %v896
      %v912 = vsel %vm909, %v896, %v898
      %v913 = vsel %vm909, %v898, %v900
      %v914 = vsel %vm909, %v900, %v902
      %v915 = vsel %vm909, %v902, %v904
      %v916 = vsel %vm909, %v904, %v906
      %v917 = vsel %vm909, %v906, %v908
      %935 = vrot.lane.b32.xlu0 %v635, 62
      %v936 = vpop.permute.xlu0 %935
      %937 = vrot.lane.b32.xlu0 %v636, 62
      %v938 = vpop.permute.xlu0 %937
      %939 = vrot.lane.b32.xlu0 %v637, 62
      %v940 = vpop.permute.xlu0 %939
      %941 = vrot.lane.b32.xlu0 %v638, 62
      %v942 = vpop.permute.xlu0 %941
      %943 = vrot.lane.b32.xlu0 %v639, 62
      %v944 = vpop.permute.xlu0 %943
      %945 = vrot.lane.b32.xlu0 %v640, 62
      %v946 = vpop.permute.xlu0 %945
      %947 = vrot.lane.b32.xlu0 %v641, 62
      %v948 = vpop.permute.xlu0 %947
      %949 = vrot.lane.b32.xlu0 %v642, 62
      %v950 = vpop.permute.xlu0 %949
      %951 = vrot.lane.b32.xlu0 %v643, 62
      %v952 = vpop.permute.xlu0 %951
      %vm953 = vcmask 506880
      %v954 = vsel %vm953, %v936, %v938
      %v955 = vsel %vm953, %v938, %v940
      %v956 = vsel %vm953, %v940, %v942
      %v957 = vsel %vm953, %v942, %v944
      %v958 = vsel %vm953, %v944, %v946
      %v959 = vsel %vm953, %v946, %v948
      %v960 = vsel %vm953, %v948, %v950
      %v961 = vsel %vm953, %v950, %v952
      %vm970 = vcmask 588800
      %v972 = vsel %vm970, %v316, 0
      %974 = vmatpush.msra.mxu0 0.0
      %975 = vmatpush.msra.mxu0 0.0
      %976 = vmatpush.msra.mxu0 0.0
      %977 = vmatpush.msra.mxu0 0.0
      %978 = vmatpush.msra.mxu0 0.0
      %979 = vmatpush.msra.mxu0 0.0
      %980 = vmatpush.msra.mxu0 0.0
      %981 = vmatpush.msra.mxu0 %v954
      %982 = vmatpush.msra.mxu0 %v910
      %983 = vmatpush.msra.mxu0 %v875
      %984 = vmatpush.msra.mxu0 %v832
      %985 = vmatpush.msra.mxu0 %v788
      %986 = vmatpush.msra.mxu0 %v753
      %987 = vmatpush.msra.mxu0 %v709
      %988 = vmatpush.msra.mxu0 %v665
      %989 = vmatpush.msra.mxu0 %v386
      %990 = vmatmul.f32.gmra.mxu0 %v972
      %v991 = vpop.f32.mrf.mxu0
      %v992 = vadd.f32 0.0, %v991
      %993 = vdwg.mxu0
      %994 = vmatpush.msra.mxu0 0.0
      %995 = vmatpush.msra.mxu0 0.0
      %996 = vmatpush.msra.mxu0 0.0
      %997 = vmatpush.msra.mxu0 0.0
      %998 = vmatpush.msra.mxu0 0.0
      %999 = vmatpush.msra.mxu0 0.0
      %1000 = vmatpush.msra.mxu0 0.0
      %1001 = vmatpush.msra.mxu0 %v955
      %1002 = vmatpush.msra.mxu0 %v911
      %1003 = vmatpush.msra.mxu0 %v876
      %1004 = vmatpush.msra.mxu0 %v833
      %1005 = vmatpush.msra.mxu0 %v789
      %1006 = vmatpush.msra.mxu0 %v754
      %1007 = vmatpush.msra.mxu0 %v710
      %1008 = vmatpush.msra.mxu0 %v666
      %1009 = vmatpush.msra.mxu0 %v387
      %1010 = vmatmul.f32.gmra.mxu0 %v972
      %v1011 = vpop.f32.mrf.mxu0
      %v1012 = vadd.f32 0.0, %v1011
      %1013 = vdwg.mxu0
      %1014 = vmatpush.msra.mxu0 0.0
      %1015 = vmatpush.msra.mxu0 0.0
      %1016 = vmatpush.msra.mxu0 0.0
      %1017 = vmatpush.msra.mxu0 0.0
      %1018 = vmatpush.msra.mxu0 0.0
      %1019 = vmatpush.msra.mxu0 0.0
      %1020 = vmatpush.msra.mxu0 0.0
      %1021 = vmatpush.msra.mxu0 %v956
      %1022 = vmatpush.msra.mxu0 %v912
      %1023 = vmatpush.msra.mxu0 %v877
      %1024 = vmatpush.msra.mxu0 %v834
      %1025 = vmatpush.msra.mxu0 %v790
      %1026 = vmatpush.msra.mxu0 %v755
      %1027 = vmatpush.msra.mxu0 %v711
      %1028 = vmatpush.msra.mxu0 %v667
      %1029 = vmatpush.msra.mxu0 %v388
      %1030 = vmatmul.f32.gmra.mxu0 %v972
      %v1031 = vpop.f32.mrf.mxu0
      %v1032 = vadd.f32 0.0, %v1031
      %1033 = vdwg.mxu0
      %1034 = vmatpush.msra.mxu0 0.0
      %1035 = vmatpush.msra.mxu0 0.0
      %1036 = vmatpush.msra.mxu0 0.0
      %1037 = vmatpush.msra.mxu0 0.0
      %1038 = vmatpush.msra.mxu0 0.0
      %1039 = vmatpush.msra.mxu0 0.0
      %1040 = vmatpush.msra.mxu0 0.0
      %1041 = vmatpush.msra.mxu0 %v957
      %1042 = vmatpush.msra.mxu0 %v913
      %1043 = vmatpush.msra.mxu0 %v878
      %1044 = vmatpush.msra.mxu0 %v835
      %1045 = vmatpush.msra.mxu0 %v791
      %1046 = vmatpush.msra.mxu0 %v756
      %1047 = vmatpush.msra.mxu0 %v712
      %1048 = vmatpush.msra.mxu0 %v668
      %1049 = vmatpush.msra.mxu0 %v389
      %1050 = vmatmul.f32.gmra.mxu0 %v972
      %v1051 = vpop.f32.mrf.mxu0
      %v1052 = vadd.f32 0.0, %v1051
      %1053 = vdwg.mxu0
      %1054 = vmatpush.msra.mxu0 0.0
      %1055 = vmatpush.msra.mxu0 0.0
      %1056 = vmatpush.msra.mxu0 0.0
      %1057 = vmatpush.msra.mxu0 0.0
      %1058 = vmatpush.msra.mxu0 0.0
      %1059 = vmatpush.msra.mxu0 0.0
      %1060 = vmatpush.msra.mxu0 0.0
      %1061 = vmatpush.msra.mxu0 %v958
      %1062 = vmatpush.msra.mxu0 %v914
      %1063 = vmatpush.msra.mxu0 %v879
      %1064 = vmatpush.msra.mxu0 %v836
      %1065 = vmatpush.msra.mxu0 %v792
      %1066 = vmatpush.msra.mxu0 %v757
      %1067 = vmatpush.msra.mxu0 %v713
      %1068 = vmatpush.msra.mxu0 %v669
      %1069 = vmatpush.msra.mxu0 %v390
      %1070 = vmatmul.f32.gmra.mxu0 %v972
      %v1071 = vpop.f32.mrf.mxu0
      %v1072 = vadd.f32 0.0, %v1071
      %1073 = vdwg.mxu0
      %1074 = vmatpush.msra.mxu0 0.0
      %1075 = vmatpush.msra.mxu0 0.0
      %1076 = vmatpush.msra.mxu0 0.0
      %1077 = vmatpush.msra.mxu0 0.0
      %1078 = vmatpush.msra.mxu0 0.0
      %1079 = vmatpush.msra.mxu0 0.0
      %1080 = vmatpush.msra.mxu0 0.0
      %1081 = vmatpush.msra.mxu0 %v959
      %1082 = vmatpush.msra.mxu0 %v915
      %1083 = vmatpush.msra.mxu0 %v880
      %1084 = vmatpush.msra.mxu0 %v837
      %1085 = vmatpush.msra.mxu0 %v793
      %1086 = vmatpush.msra.mxu0 %v758
      %1087 = vmatpush.msra.mxu0 %v714
      %1088 = vmatpush.msra.mxu0 %v670
      %1089 = vmatpush.msra.mxu0 %v391
      %1090 = vmatmul.f32.gmra.mxu0 %v972
      %v1091 = vpop.f32.mrf.mxu0
      %v1092 = vadd.f32 0.0, %v1091
      %1093 = vdwg.mxu0
      %1094 = vmatpush.msra.mxu0 0.0
      %1095 = vmatpush.msra.mxu0 0.0
      %1096 = vmatpush.msra.mxu0 0.0
      %1097 = vmatpush.msra.mxu0 0.0
      %1098 = vmatpush.msra.mxu0 0.0
      %1099 = vmatpush.msra.mxu0 0.0
      %1100 = vmatpush.msra.mxu0 0.0
      %1101 = vmatpush.msra.mxu0 %v960
      %1102 = vmatpush.msra.mxu0 %v916
      %1103 = vmatpush.msra.mxu0 %v881
      %1104 = vmatpush.msra.mxu0 %v838
      %1105 = vmatpush.msra.mxu0 %v794
      %1106 = vmatpush.msra.mxu0 %v759
      %1107 = vmatpush.msra.mxu0 %v715
      %1108 = vmatpush.msra.mxu0 %v671
      %1109 = vmatpush.msra.mxu0 %v392
      %1110 = vmatmul.f32.gmra.mxu0 %v972
      %v1111 = vpop.f32.mrf.mxu0
      %v1112 = vadd.f32 0.0, %v1111
      %1113 = vdwg.mxu0
      %1114 = vmatpush.msra.mxu0 0.0
      %1115 = vmatpush.msra.mxu0 0.0
      %1116 = vmatpush.msra.mxu0 0.0
      %1117 = vmatpush.msra.mxu0 0.0
      %1118 = vmatpush.msra.mxu0 0.0
      %1119 = vmatpush.msra.mxu0 0.0
      %1120 = vmatpush.msra.mxu0 0.0
      %1121 = vmatpush.msra.mxu0 %v961
      %1122 = vmatpush.msra.mxu0 %v917
      %1123 = vmatpush.msra.mxu0 %v882
      %1124 = vmatpush.msra.mxu0 %v839
      %1125 = vmatpush.msra.mxu0 %v795
      %1126 = vmatpush.msra.mxu0 %v760
      %1127 = vmatpush.msra.mxu0 %v716
      %1128 = vmatpush.msra.mxu0 %v672
      %1129 = vmatpush.msra.mxu0 %v393
      %1130 = vmatmul.f32.gmra.mxu0 %v972
      %v1131 = vpop.f32.mrf.mxu0
      %v1132 = vadd.f32 0.0, %v1131
      %1133 = vdwg.mxu0
      %v1134 = vld [vmem:[%s3] sm:$0xff]
      %1136 = vset.pattern.permute.xlu0 0
      %1137 = vperm.xlu0 %1136, %v1134
      %v1138 = vpop.permute.xlu0 %1137
      %v1140 = vmul.f32 %v992, %v1138
      %v1141 = vmul.f32 %v1012, %v1138
      %v1142 = vmul.f32 %v1032, %v1138
      %v1143 = vmul.f32 %v1052, %v1138
      %v1144 = vmul.f32 %v1072, %v1138
      %v1145 = vmul.f32 %v1092, %v1138
      %v1146 = vmul.f32 %v1112, %v1138
      %v1147 = vmul.f32 %v1132, %v1138
      %v1148 = vld [vmem:[%s4] sm:$0xff]
      %1150 = vset.pattern.permute.xlu0 0
      %1151 = vperm.xlu0 %1150, %v1148
      %v1152 = vpop.permute.xlu0 %1151
      %v1154 = vadd.f32 %v1140, %v1152
      %v1155 = vadd.f32 %v1141, %v1152
      %v1156 = vadd.f32 %v1142, %v1152
      %v1157 = vadd.f32 %v1143, %v1152
      %v1158 = vadd.f32 %v1144, %v1152
      %v1159 = vadd.f32 %v1145, %v1152
      %v1160 = vadd.f32 %v1146, %v1152
      %v1161 = vadd.f32 %v1147, %v1152
      %v1162 = vmax.f32 %v1154, 0.0
      %v1163 = vmax.f32 %v1155, 0.0
      %v1164 = vmax.f32 %v1156, 0.0
      %v1165 = vmax.f32 %v1157, 0.0
      %v1166 = vmax.f32 %v1158, 0.0
      %v1167 = vmax.f32 %v1159, 0.0
      %v1168 = vmax.f32 %v1160, 0.0
      %v1169 = vmax.f32 %v1161, 0.0
      %v1170 = vld [vmem:[%s5] sm:$0xff]
      %1179 = vrot.lane.b32.xlu0 %v1162, 33
      %v1180 = vpop.permute.xlu0 %1179
      %1181 = vrot.lane.b32.xlu0 %v1163, 33
      %v1182 = vpop.permute.xlu0 %1181
      %1183 = vrot.lane.b32.xlu0 %v1164, 33
      %v1184 = vpop.permute.xlu0 %1183
      %1185 = vrot.lane.b32.xlu0 %v1165, 33
      %v1186 = vpop.permute.xlu0 %1185
      %1187 = vrot.lane.b32.xlu0 %v1166, 33
      %v1188 = vpop.permute.xlu0 %1187
      %1189 = vrot.lane.b32.xlu0 %v1167, 33
      %v1190 = vpop.permute.xlu0 %1189
      %1191 = vrot.lane.b32.xlu0 %v1168, 33
      %v1192 = vpop.permute.xlu0 %1191
      %1193 = vrot.lane.b32.xlu0 %v1169, 33
      %v1194 = vpop.permute.xlu0 %1193
      %v1195 = vsel %vm341, %v1180, %v1182
      %v1196 = vsel %vm341, %v1182, %v1184
      %v1197 = vsel %vm341, %v1184, %v1186
      %v1198 = vsel %vm341, %v1186, %v1188
      %v1199 = vsel %vm341, %v1188, %v1190
      %v1200 = vsel %vm341, %v1190, %v1192
      %v1201 = vsel %vm341, %v1192, %v1194
      %v1211 = vsel %vm341, 0.0, %v1180
      %v1212 = vsel %vm341, %v1194, 0.0
      %v1213 = vmul.f32 %v1211, %v378
      %v1214 = vmul.f32 %v1195, %v379
      %v1215 = vmul.f32 %v1196, %v380
      %v1216 = vmul.f32 %v1197, %v381
      %v1217 = vmul.f32 %v1198, %v382
      %v1218 = vmul.f32 %v1199, %v383
      %v1219 = vmul.f32 %v1200, %v384
      %v1220 = vmul.f32 %v1201, %v385
      %v1221 = vmul.f32 %v1211, %v427
      %v1222 = vmul.f32 %v1195, %v443
      %v1223 = vmul.f32 %v1196, %v444
      %v1224 = vmul.f32 %v1197, %v445
      %v1225 = vmul.f32 %v1198, %v446
      %v1226 = vmul.f32 %v1199, %v447
      %v1227 = vmul.f32 %v1200, %v448
      %v1228 = vmul.f32 %v1201, %v449
      %v1229 = vmul.f32 %v1212, %v441
      %v1230 = vmul.f32 %v1211, %v477
      %v1231 = vmul.f32 %v1195, %v493
      %v1232 = vmul.f32 %v1196, %v494
      %v1233 = vmul.f32 %v1197, %v495
      %v1234 = vmul.f32 %v1198, %v496
      %v1235 = vmul.f32 %v1199, %v497
      %v1236 = vmul.f32 %v1200, %v498
      %v1237 = vmul.f32 %v1201, %v499
      %v1238 = vmul.f32 %v1212, %v491
      %v1239 = vmul.f32 %v1211, %v519
      %v1240 = vmul.f32 %v1195, %v535
      %v1241 = vmul.f32 %v1196, %v536
      %v1242 = vmul.f32 %v1197, %v537
      %v1243 = vmul.f32 %v1198, %v538
      %v1244 = vmul.f32 %v1199, %v539
      %v1245 = vmul.f32 %v1200, %v540
      %v1246 = vmul.f32 %v1201, %v541
      %v1247 = vmul.f32 %v1212, %v533
      %v1248 = vmul.f32 %v1211, %v561
      %v1249 = vmul.f32 %v1195, %v577
      %v1250 = vmul.f32 %v1196, %v578
      %v1251 = vmul.f32 %v1197, %v579
      %v1252 = vmul.f32 %v1198, %v580
      %v1253 = vmul.f32 %v1199, %v581
      %v1254 = vmul.f32 %v1200, %v582
      %v1255 = vmul.f32 %v1201, %v583
      %v1256 = vmul.f32 %v1212, %v575
      %v1257 = vmul.f32 %v1211, %v603
      %v1258 = vmul.f32 %v1195, %v619
      %v1259 = vmul.f32 %v1196, %v620
      %v1260 = vmul.f32 %v1197, %v621
      %v1261 = vmul.f32 %v1198, %v622
      %v1262 = vmul.f32 %v1199, %v623
      %v1263 = vmul.f32 %v1200, %v624
      %v1264 = vmul.f32 %v1201, %v625
      %v1265 = vmul.f32 %v1212, %v617
      %1268 = vrot.lane.b32.xlu0 %v1211, 127
      %v1269 = vpop.permute.xlu0 %1268
      %1270 = vrot.lane.b32.xlu0 %v1195, 127
      %v1271 = vpop.permute.xlu0 %1270
      %1272 = vrot.lane.b32.xlu0 %v1196, 127
      %v1273 = vpop.permute.xlu0 %1272
      %1274 = vrot.lane.b32.xlu0 %v1197, 127
      %v1275 = vpop.permute.xlu0 %1274
      %1276 = vrot.lane.b32.xlu0 %v1198, 127
      %v1277 = vpop.permute.xlu0 %1276
      %1278 = vrot.lane.b32.xlu0 %v1199, 127
      %v1279 = vpop.permute.xlu0 %1278
      %1280 = vrot.lane.b32.xlu0 %v1200, 127
      %v1281 = vpop.permute.xlu0 %1280
      %1282 = vrot.lane.b32.xlu0 %v1201, 127
      %v1283 = vpop.permute.xlu0 %1282
      %1284 = vrot.lane.b32.xlu0 %v1212, 127
      %v1285 = vpop.permute.xlu0 %1284
      %v1286 = vsel %vm664, %v1269, %v1271
      %v1287 = vsel %vm664, %v1271, %v1273
      %v1288 = vsel %vm664, %v1273, %v1275
      %v1289 = vsel %vm664, %v1275, %v1277
      %v1290 = vsel %vm664, %v1277, %v1279
      %v1291 = vsel %vm664, %v1279, %v1281
      %v1292 = vsel %vm664, %v1281, %v1283
      %v1293 = vsel %vm664, %v1283, %v1285
      %1311 = vrot.lane.b32.xlu0 %v1221, 126
      %v1312 = vpop.permute.xlu0 %1311
      %1313 = vrot.lane.b32.xlu0 %v1222, 126
      %v1314 = vpop.permute.xlu0 %1313
      %1315 = vrot.lane.b32.xlu0 %v1223, 126
      %v1316 = vpop.permute.xlu0 %1315
      %1317 = vrot.lane.b32.xlu0 %v1224, 126
      %v1318 = vpop.permute.xlu0 %1317
      %1319 = vrot.lane.b32.xlu0 %v1225, 126
      %v1320 = vpop.permute.xlu0 %1319
      %1321 = vrot.lane.b32.xlu0 %v1226, 126
      %v1322 = vpop.permute.xlu0 %1321
      %1323 = vrot.lane.b32.xlu0 %v1227, 126
      %v1324 = vpop.permute.xlu0 %1323
      %1325 = vrot.lane.b32.xlu0 %v1228, 126
      %v1326 = vpop.permute.xlu0 %1325
      %1327 = vrot.lane.b32.xlu0 %v1229, 126
      %v1328 = vpop.permute.xlu0 %1327
      %v1329 = vsel %vm708, %v1312, %v1314
      %v1330 = vsel %vm708, %v1314, %v1316
      %v1331 = vsel %vm708, %v1316, %v1318
      %v1332 = vsel %vm708, %v1318, %v1320
      %v1333 = vsel %vm708, %v1320, %v1322
      %v1334 = vsel %vm708, %v1322, %v1324
      %v1335 = vsel %vm708, %v1324, %v1326
      %v1336 = vsel %vm708, %v1326, %v1328
      %1354 = vrot.lane.b32.xlu0 %v1230, 96
      %v1355 = vpop.permute.xlu0 %1354
      %1356 = vrot.lane.b32.xlu0 %v1231, 96
      %v1357 = vpop.permute.xlu0 %1356
      %1358 = vrot.lane.b32.xlu0 %v1232, 96
      %v1359 = vpop.permute.xlu0 %1358
      %1360 = vrot.lane.b32.xlu0 %v1233, 96
      %v1361 = vpop.permute.xlu0 %1360
      %1362 = vrot.lane.b32.xlu0 %v1234, 96
      %v1363 = vpop.permute.xlu0 %1362
      %1364 = vrot.lane.b32.xlu0 %v1235, 96
      %v1365 = vpop.permute.xlu0 %1364
      %1366 = vrot.lane.b32.xlu0 %v1236, 96
      %v1367 = vpop.permute.xlu0 %1366
      %1368 = vrot.lane.b32.xlu0 %v1237, 96
      %v1369 = vpop.permute.xlu0 %1368
      %1370 = vrot.lane.b32.xlu0 %v1238, 96
      %v1371 = vpop.permute.xlu0 %1370
      %v1372 = vsel %vm752, %v1355, %v1357
      %v1373 = vsel %vm752, %v1357, %v1359
      %v1374 = vsel %vm752, %v1359, %v1361
      %v1375 = vsel %vm752, %v1361, %v1363
      %v1376 = vsel %vm752, %v1363, %v1365
      %v1377 = vsel %vm752, %v1365, %v1367
      %v1378 = vsel %vm752, %v1367, %v1369
      %v1379 = vsel %vm752, %v1369, %v1371
      %1388 = vrot.lane.b32.xlu0 %v1211, 95
      %v1389 = vpop.permute.xlu0 %1388
      %1390 = vrot.lane.b32.xlu0 %v1195, 95
      %v1391 = vpop.permute.xlu0 %1390
      %1392 = vrot.lane.b32.xlu0 %v1196, 95
      %v1393 = vpop.permute.xlu0 %1392
      %1394 = vrot.lane.b32.xlu0 %v1197, 95
      %v1395 = vpop.permute.xlu0 %1394
      %1396 = vrot.lane.b32.xlu0 %v1198, 95
      %v1397 = vpop.permute.xlu0 %1396
      %1398 = vrot.lane.b32.xlu0 %v1199, 95
      %v1399 = vpop.permute.xlu0 %1398
      %1400 = vrot.lane.b32.xlu0 %v1200, 95
      %v1401 = vpop.permute.xlu0 %1400
      %1402 = vrot.lane.b32.xlu0 %v1201, 95
      %v1403 = vpop.permute.xlu0 %1402
      %1404 = vrot.lane.b32.xlu0 %v1212, 95
      %v1405 = vpop.permute.xlu0 %1404
      %v1406 = vsel %vm787, %v1389, %v1391
      %v1407 = vsel %vm787, %v1391, %v1393
      %v1408 = vsel %vm787, %v1393, %v1395
      %v1409 = vsel %vm787, %v1395, %v1397
      %v1410 = vsel %vm787, %v1397, %v1399
      %v1411 = vsel %vm787, %v1399, %v1401
      %v1412 = vsel %vm787, %v1401, %v1403
      %v1413 = vsel %vm787, %v1403, %v1405
      %1431 = vrot.lane.b32.xlu0 %v1239, 94
      %v1432 = vpop.permute.xlu0 %1431
      %1433 = vrot.lane.b32.xlu0 %v1240, 94
      %v1434 = vpop.permute.xlu0 %1433
      %1435 = vrot.lane.b32.xlu0 %v1241, 94
      %v1436 = vpop.permute.xlu0 %1435
      %1437 = vrot.lane.b32.xlu0 %v1242, 94
      %v1438 = vpop.permute.xlu0 %1437
      %1439 = vrot.lane.b32.xlu0 %v1243, 94
      %v1440 = vpop.permute.xlu0 %1439
      %1441 = vrot.lane.b32.xlu0 %v1244, 94
      %v1442 = vpop.permute.xlu0 %1441
      %1443 = vrot.lane.b32.xlu0 %v1245, 94
      %v1444 = vpop.permute.xlu0 %1443
      %1445 = vrot.lane.b32.xlu0 %v1246, 94
      %v1446 = vpop.permute.xlu0 %1445
      %1447 = vrot.lane.b32.xlu0 %v1247, 94
      %v1448 = vpop.permute.xlu0 %1447
      %v1449 = vsel %vm831, %v1432, %v1434
      %v1450 = vsel %vm831, %v1434, %v1436
      %v1451 = vsel %vm831, %v1436, %v1438
      %v1452 = vsel %vm831, %v1438, %v1440
      %v1453 = vsel %vm831, %v1440, %v1442
      %v1454 = vsel %vm831, %v1442, %v1444
      %v1455 = vsel %vm831, %v1444, %v1446
      %v1456 = vsel %vm831, %v1446, %v1448
      %1474 = vrot.lane.b32.xlu0 %v1248, 64
      %v1475 = vpop.permute.xlu0 %1474
      %1476 = vrot.lane.b32.xlu0 %v1249, 64
      %v1477 = vpop.permute.xlu0 %1476
      %1478 = vrot.lane.b32.xlu0 %v1250, 64
      %v1479 = vpop.permute.xlu0 %1478
      %1480 = vrot.lane.b32.xlu0 %v1251, 64
      %v1481 = vpop.permute.xlu0 %1480
      %1482 = vrot.lane.b32.xlu0 %v1252, 64
      %v1483 = vpop.permute.xlu0 %1482
      %1484 = vrot.lane.b32.xlu0 %v1253, 64
      %v1485 = vpop.permute.xlu0 %1484
      %1486 = vrot.lane.b32.xlu0 %v1254, 64
      %v1487 = vpop.permute.xlu0 %1486
      %1488 = vrot.lane.b32.xlu0 %v1255, 64
      %v1489 = vpop.permute.xlu0 %1488
      %1490 = vrot.lane.b32.xlu0 %v1256, 64
      %v1491 = vpop.permute.xlu0 %1490
      %v1492 = vsel %vm576, %v1475, %v1477
      %v1493 = vsel %vm576, %v1477, %v1479
      %v1494 = vsel %vm576, %v1479, %v1481
      %v1495 = vsel %vm576, %v1481, %v1483
      %v1496 = vsel %vm576, %v1483, %v1485
      %v1497 = vsel %vm576, %v1485, %v1487
      %v1498 = vsel %vm576, %v1487, %v1489
      %v1499 = vsel %vm576, %v1489, %v1491
      %1508 = vrot.lane.b32.xlu0 %v1211, 63
      %v1509 = vpop.permute.xlu0 %1508
      %1510 = vrot.lane.b32.xlu0 %v1195, 63
      %v1511 = vpop.permute.xlu0 %1510
      %1512 = vrot.lane.b32.xlu0 %v1196, 63
      %v1513 = vpop.permute.xlu0 %1512
      %1514 = vrot.lane.b32.xlu0 %v1197, 63
      %v1515 = vpop.permute.xlu0 %1514
      %1516 = vrot.lane.b32.xlu0 %v1198, 63
      %v1517 = vpop.permute.xlu0 %1516
      %1518 = vrot.lane.b32.xlu0 %v1199, 63
      %v1519 = vpop.permute.xlu0 %1518
      %1520 = vrot.lane.b32.xlu0 %v1200, 63
      %v1521 = vpop.permute.xlu0 %1520
      %1522 = vrot.lane.b32.xlu0 %v1201, 63
      %v1523 = vpop.permute.xlu0 %1522
      %1524 = vrot.lane.b32.xlu0 %v1212, 63
      %v1525 = vpop.permute.xlu0 %1524
      %v1526 = vsel %vm909, %v1509, %v1511
      %v1527 = vsel %vm909, %v1511, %v1513
      %v1528 = vsel %vm909, %v1513, %v1515
      %v1529 = vsel %vm909, %v1515, %v1517
      %v1530 = vsel %vm909, %v1517, %v1519
      %v1531 = vsel %vm909, %v1519, %v1521
      %v1532 = vsel %vm909, %v1521, %v1523
      %v1533 = vsel %vm909, %v1523, %v1525
      %1551 = vrot.lane.b32.xlu0 %v1257, 62
      %v1552 = vpop.permute.xlu0 %1551
      %1553 = vrot.lane.b32.xlu0 %v1258, 62
      %v1554 = vpop.permute.xlu0 %1553
      %1555 = vrot.lane.b32.xlu0 %v1259, 62
      %v1556 = vpop.permute.xlu0 %1555
      %1557 = vrot.lane.b32.xlu0 %v1260, 62
      %v1558 = vpop.permute.xlu0 %1557
      %1559 = vrot.lane.b32.xlu0 %v1261, 62
      %v1560 = vpop.permute.xlu0 %1559
      %1561 = vrot.lane.b32.xlu0 %v1262, 62
      %v1562 = vpop.permute.xlu0 %1561
      %1563 = vrot.lane.b32.xlu0 %v1263, 62
      %v1564 = vpop.permute.xlu0 %1563
      %1565 = vrot.lane.b32.xlu0 %v1264, 62
      %v1566 = vpop.permute.xlu0 %1565
      %1567 = vrot.lane.b32.xlu0 %v1265, 62
      %v1568 = vpop.permute.xlu0 %1567
      %v1569 = vsel %vm953, %v1552, %v1554
      %v1570 = vsel %vm953, %v1554, %v1556
      %v1571 = vsel %vm953, %v1556, %v1558
      %v1572 = vsel %vm953, %v1558, %v1560
      %v1573 = vsel %vm953, %v1560, %v1562
      %v1574 = vsel %vm953, %v1562, %v1564
      %v1575 = vsel %vm953, %v1564, %v1566
      %v1576 = vsel %vm953, %v1566, %v1568
      %v1586 = vsel %vm970, %v1170, 0
      %1588 = vmatpush.msra.mxu0 0.0
      %1589 = vmatpush.msra.mxu0 0.0
      %1590 = vmatpush.msra.mxu0 0.0
      %1591 = vmatpush.msra.mxu0 0.0
      %1592 = vmatpush.msra.mxu0 0.0
      %1593 = vmatpush.msra.mxu0 0.0
      %1594 = vmatpush.msra.mxu0 0.0
      %1595 = vmatpush.msra.mxu0 %v1569
      %1596 = vmatpush.msra.mxu0 %v1526
      %1597 = vmatpush.msra.mxu0 %v1492
      %1598 = vmatpush.msra.mxu0 %v1449
      %1599 = vmatpush.msra.mxu0 %v1406
      %1600 = vmatpush.msra.mxu0 %v1372
      %1601 = vmatpush.msra.mxu0 %v1329
      %1602 = vmatpush.msra.mxu0 %v1286
      %1603 = vmatpush.msra.mxu0 %v1213
      %1604 = vmatmul.f32.gmra.mxu0 %v1586
      %v1605 = vpop.f32.mrf.mxu0
      %v1606 = vadd.f32 0.0, %v1605
      %1607 = vdwg.mxu0
      %1608 = vmatpush.msra.mxu0 0.0
      %1609 = vmatpush.msra.mxu0 0.0
      %1610 = vmatpush.msra.mxu0 0.0
      %1611 = vmatpush.msra.mxu0 0.0
      %1612 = vmatpush.msra.mxu0 0.0
      %1613 = vmatpush.msra.mxu0 0.0
      %1614 = vmatpush.msra.mxu0 0.0
      %1615 = vmatpush.msra.mxu0 %v1570
      %1616 = vmatpush.msra.mxu0 %v1527
      %1617 = vmatpush.msra.mxu0 %v1493
      %1618 = vmatpush.msra.mxu0 %v1450
      %1619 = vmatpush.msra.mxu0 %v1407
      %1620 = vmatpush.msra.mxu0 %v1373
      %1621 = vmatpush.msra.mxu0 %v1330
      %1622 = vmatpush.msra.mxu0 %v1287
      %1623 = vmatpush.msra.mxu0 %v1214
      %1624 = vmatmul.f32.gmra.mxu0 %v1586
      %v1625 = vpop.f32.mrf.mxu0
      %v1626 = vadd.f32 0.0, %v1625
      %1627 = vdwg.mxu0
      %1628 = vmatpush.msra.mxu0 0.0
      %1629 = vmatpush.msra.mxu0 0.0
      %1630 = vmatpush.msra.mxu0 0.0
      %1631 = vmatpush.msra.mxu0 0.0
      %1632 = vmatpush.msra.mxu0 0.0
      %1633 = vmatpush.msra.mxu0 0.0
      %1634 = vmatpush.msra.mxu0 0.0
      %1635 = vmatpush.msra.mxu0 %v1571
      %1636 = vmatpush.msra.mxu0 %v1528
      %1637 = vmatpush.msra.mxu0 %v1494
      %1638 = vmatpush.msra.mxu0 %v1451
      %1639 = vmatpush.msra.mxu0 %v1408
      %1640 = vmatpush.msra.mxu0 %v1374
      %1641 = vmatpush.msra.mxu0 %v1331
      %1642 = vmatpush.msra.mxu0 %v1288
      %1643 = vmatpush.msra.mxu0 %v1215
      %1644 = vmatmul.f32.gmra.mxu0 %v1586
      %v1645 = vpop.f32.mrf.mxu0
      %v1646 = vadd.f32 0.0, %v1645
      %1647 = vdwg.mxu0
      %1648 = vmatpush.msra.mxu0 0.0
      %1649 = vmatpush.msra.mxu0 0.0
      %1650 = vmatpush.msra.mxu0 0.0
      %1651 = vmatpush.msra.mxu0 0.0
      %1652 = vmatpush.msra.mxu0 0.0
      %1653 = vmatpush.msra.mxu0 0.0
      %1654 = vmatpush.msra.mxu0 0.0
      %1655 = vmatpush.msra.mxu0 %v1572
      %1656 = vmatpush.msra.mxu0 %v1529
      %1657 = vmatpush.msra.mxu0 %v1495
      %1658 = vmatpush.msra.mxu0 %v1452
      %1659 = vmatpush.msra.mxu0 %v1409
      %1660 = vmatpush.msra.mxu0 %v1375
      %1661 = vmatpush.msra.mxu0 %v1332
      %1662 = vmatpush.msra.mxu0 %v1289
      %1663 = vmatpush.msra.mxu0 %v1216
      %1664 = vmatmul.f32.gmra.mxu0 %v1586
      %v1665 = vpop.f32.mrf.mxu0
      %v1666 = vadd.f32 0.0, %v1665
      %1667 = vdwg.mxu0
      %1668 = vmatpush.msra.mxu0 0.0
      %1669 = vmatpush.msra.mxu0 0.0
      %1670 = vmatpush.msra.mxu0 0.0
      %1671 = vmatpush.msra.mxu0 0.0
      %1672 = vmatpush.msra.mxu0 0.0
      %1673 = vmatpush.msra.mxu0 0.0
      %1674 = vmatpush.msra.mxu0 0.0
      %1675 = vmatpush.msra.mxu0 %v1573
      %1676 = vmatpush.msra.mxu0 %v1530
      %1677 = vmatpush.msra.mxu0 %v1496
      %1678 = vmatpush.msra.mxu0 %v1453
      %1679 = vmatpush.msra.mxu0 %v1410
      %1680 = vmatpush.msra.mxu0 %v1376
      %1681 = vmatpush.msra.mxu0 %v1333
      %1682 = vmatpush.msra.mxu0 %v1290
      %1683 = vmatpush.msra.mxu0 %v1217
      %1684 = vmatmul.f32.gmra.mxu0 %v1586
      %v1685 = vpop.f32.mrf.mxu0
      %v1686 = vadd.f32 0.0, %v1685
      %1687 = vdwg.mxu0
      %1688 = vmatpush.msra.mxu0 0.0
      %1689 = vmatpush.msra.mxu0 0.0
      %1690 = vmatpush.msra.mxu0 0.0
      %1691 = vmatpush.msra.mxu0 0.0
      %1692 = vmatpush.msra.mxu0 0.0
      %1693 = vmatpush.msra.mxu0 0.0
      %1694 = vmatpush.msra.mxu0 0.0
      %1695 = vmatpush.msra.mxu0 %v1574
      %1696 = vmatpush.msra.mxu0 %v1531
      %1697 = vmatpush.msra.mxu0 %v1497
      %1698 = vmatpush.msra.mxu0 %v1454
      %1699 = vmatpush.msra.mxu0 %v1411
      %1700 = vmatpush.msra.mxu0 %v1377
      %1701 = vmatpush.msra.mxu0 %v1334
      %1702 = vmatpush.msra.mxu0 %v1291
      %1703 = vmatpush.msra.mxu0 %v1218
      %1704 = vmatmul.f32.gmra.mxu0 %v1586
      %v1705 = vpop.f32.mrf.mxu0
      %v1706 = vadd.f32 0.0, %v1705
      %1707 = vdwg.mxu0
      %1708 = vmatpush.msra.mxu0 0.0
      %1709 = vmatpush.msra.mxu0 0.0
      %1710 = vmatpush.msra.mxu0 0.0
      %1711 = vmatpush.msra.mxu0 0.0
      %1712 = vmatpush.msra.mxu0 0.0
      %1713 = vmatpush.msra.mxu0 0.0
      %1714 = vmatpush.msra.mxu0 0.0
      %1715 = vmatpush.msra.mxu0 %v1575
      %1716 = vmatpush.msra.mxu0 %v1532
      %1717 = vmatpush.msra.mxu0 %v1498
      %1718 = vmatpush.msra.mxu0 %v1455
      %1719 = vmatpush.msra.mxu0 %v1412
      %1720 = vmatpush.msra.mxu0 %v1378
      %1721 = vmatpush.msra.mxu0 %v1335
      %1722 = vmatpush.msra.mxu0 %v1292
      %1723 = vmatpush.msra.mxu0 %v1219
      %1724 = vmatmul.f32.gmra.mxu0 %v1586
      %v1725 = vpop.f32.mrf.mxu0
      %v1726 = vadd.f32 0.0, %v1725
      %1727 = vdwg.mxu0
      %1728 = vmatpush.msra.mxu0 0.0
      %1729 = vmatpush.msra.mxu0 0.0
      %1730 = vmatpush.msra.mxu0 0.0
      %1731 = vmatpush.msra.mxu0 0.0
      %1732 = vmatpush.msra.mxu0 0.0
      %1733 = vmatpush.msra.mxu0 0.0
      %1734 = vmatpush.msra.mxu0 0.0
      %1735 = vmatpush.msra.mxu0 %v1576
      %1736 = vmatpush.msra.mxu0 %v1533
      %1737 = vmatpush.msra.mxu0 %v1499
      %1738 = vmatpush.msra.mxu0 %v1456
      %1739 = vmatpush.msra.mxu0 %v1413
      %1740 = vmatpush.msra.mxu0 %v1379
      %1741 = vmatpush.msra.mxu0 %v1336
      %1742 = vmatpush.msra.mxu0 %v1293
      %1743 = vmatpush.msra.mxu0 %v1220
      %1744 = vmatmul.f32.gmra.mxu0 %v1586
      %v1745 = vpop.f32.mrf.mxu0
      %v1746 = vadd.f32 0.0, %v1745
      %1747 = vdwg.mxu0
      %v1748 = vld [vmem:[%s6] sm:$0xff]
      %1750 = vset.pattern.permute.xlu0 0
      %1751 = vperm.xlu0 %1750, %v1748
      %v1752 = vpop.permute.xlu0 %1751
      %v1754 = vmul.f32 %v1606, %v1752
      %v1755 = vmul.f32 %v1626, %v1752
      %v1756 = vmul.f32 %v1646, %v1752
      %v1757 = vmul.f32 %v1666, %v1752
      %v1758 = vmul.f32 %v1686, %v1752
      %v1759 = vmul.f32 %v1706, %v1752
      %v1760 = vmul.f32 %v1726, %v1752
      %v1761 = vmul.f32 %v1746, %v1752
      %v1762 = vld [vmem:[%s7] sm:$0xff]
      %1764 = vset.pattern.permute.xlu0 0
      %1765 = vperm.xlu0 %1764, %v1762
      %v1766 = vpop.permute.xlu0 %1765
      %v1768 = vadd.f32 %v1754, %v1766
      %v1769 = vadd.f32 %v1755, %v1766
      %v1770 = vadd.f32 %v1756, %v1766
      %v1771 = vadd.f32 %v1757, %v1766
      %v1772 = vadd.f32 %v1758, %v1766
      %v1773 = vadd.f32 %v1759, %v1766
      %v1774 = vadd.f32 %v1760, %v1766
      %v1775 = vadd.f32 %v1761, %v1766
      %v1776 = vmax.f32 %v1768, 0.0
      %v1777 = vmax.f32 %v1769, 0.0
      %v1778 = vmax.f32 %v1770, 0.0
      %v1779 = vmax.f32 %v1771, 0.0
      %v1780 = vmax.f32 %v1772, 0.0
      %v1781 = vmax.f32 %v1773, 0.0
      %v1782 = vmax.f32 %v1774, 0.0
      %v1783 = vmax.f32 %v1775, 0.0
      %1784 = vst [vmem:[%s305] sm:$0xff] %v1776
      %1785 = vst [vmem:[%s305 + $0x8] sm:$0xff] %v1777
      %1786 = vst [vmem:[%s305 + $0x10] sm:$0xff] %v1778
      %1787 = vst [vmem:[%s305 + $0x18] sm:$0xff] %v1779
      %1788 = vst [vmem:[%s305 + $0x20] sm:$0xff] %v1780
      %1789 = vst [vmem:[%s305 + $0x28] sm:$0xff] %v1781
      %1790 = vst [vmem:[%s305 + $0x30] sm:$0xff] %v1782
      %1791 = vst [vmem:[%s305 + $0x38] sm:$0xff] %v1783
      %p1792 = scmp.lt.s32.totalorder %s19, 1
      %s1793 = scalar_select %p1792, %s19, 1
      %s1794 = smul.addr %s1793, 8
      %s1795 = smul.addr %s1794, 8
      %s1796 = scalar_lea.vmem %s8, %s1795
      // Predicated region
      $region53: #{decoder_block_forward.1} parent=51 // pred_check
        %p1797 = pneg %p210
      $region54: #{decoder_block_forward.1} parent=51 // pred_check_branch
        %1799 = sbr.rel (%p1797) target = $region56
      $region55: #{decoder_block_forward.1} parent=51 // pred_region
        _
      $region56: #{decoder_block_forward.1} parent=51 // pred_fallthru
        _
    $region52: #{decoder_block_forward.1} parent=5 // pred_fallthru
      _
    %p1800 = scmp.le.s32.totalorder 2, %s14
    // Predicated region
    $region57: #{decoder_block_forward.1} parent=5 // pred_check
      %p1801 = pneg %p1800
    $region58: #{decoder_block_forward.1} parent=5 // pred_check_branch
      %1803 = sbr.rel (%p1801) target = $region60
    $region59: #{decoder_block_forward.1} parent=5 // pred_region
      %s1804 = ssub.s32 %s14, 2
      // Predicated region
      $region61: #{decoder_block_forward.1} parent=59 // pred_check
        %p1805 = pneg %p216
      $region62: #{decoder_block_forward.1} parent=59 // pred_check_branch
        %1807 = sbr.rel (%p1805) target = $region64
      $region63: #{decoder_block_forward.1} parent=59 // pred_region
        %p1808 = scmp.lt.s32.totalorder %s20, 1
        %s1809 = scalar_select %p1808, %s20, 1
        %s1810 = smul.addr %s1809, 8
        %s1811 = smul.addr %s1810, 8
        %s1812 = scalar_lea.vmem %s8, %s1811
      $region64: #{decoder_block_forward.1} parent=59 // pred_fallthru
        _
    $region60: #{decoder_block_forward.1} parent=5 // pred_fallthru
      _
  $region6: #{decoder_block_forward.1} parent=0 // loop_footer
    %s18 = sadd.s32 1, %s14
  $region7: #{decoder_block_forward.1} parent=0 // loop_footer_branch
    %13 = sbr.rel target = $region3
  $region8: #{decoder_block_forward.1} parent=0 // loop_exit
    _

</llo_original>
